<compile_context>
chip_gen: v7x
topology: tpu7x:2x2x1
jax: 0.10.0
libtpu: 0.0.40
codegen_flags: <defaults>
</compile_context>

<pallas_src>
import functools

import numpy as np
import jax
import jax.numpy as jnp
from jax import lax
from jax.experimental import pallas as pl
from jax.experimental.pallas import tpu as pltpu

_EPS = 1e-12        # F.normalize default eps
_TB_MAX = 1024      # cap on batch-tile rows


def _round_up(x, m):
    return ((x + m - 1) // m) * m


def _get_loss_kernel(pred_ref, target_ref, rep_ref, sel_full_ref, sel_dir_ref,
                     out_ref, *, B):
    """One batch tile.

    pred_ref   : [tb, D]
    target_ref : [tb, K*D]   (lane-dense relayout of [tb, K, D])
    rep_ref    : [D, K*D]    rep[d, k*D+d] = 1          (pred replication)
    sel_full   : [K*D, K]    1 iff position belongs to candidate k
    sel_dir    : [K*D, K]    1 iff position is one of candidate k's first 3 dims
    out_ref    : [8, 128]    element (0,0) = partial sum over this tile's rows
    """
    f32 = jnp.float32
    hi = lax.Precision.HIGHEST

    tb, D = pred_ref.shape
    pred = pred_ref[...].astype(f32)          # [tb, D]
    target = target_ref[...].astype(f32)      # [tb, KD]
    rep = rep_ref[...]                        # [D, KD]
    sel_full = sel_full_ref[...]              # [KD, K]
    sel_dir = sel_dir_ref[...]                # [KD, K]

    # Replicate pred across the K candidate segments on the (idle) MXU.
    pred_t = jnp.dot(pred, rep, precision=hi,
                     preferred_element_type=f32)                    # [tb, KD]

    # Fused elementwise sweeps over the lane-dense tile.
    diff = pred_t - target
    sq = diff * diff                                                 # (p-t)^2
    pt = pred_t * target                                             # p*t
    t2 = target * target                                             # t^2

    # Per-candidate segment reductions as small MXU matmuls (no XLU reduce trees).
    mse_sum = jnp.dot(sq, sel_full, precision=hi,
                      preferred_element_type=f32)                    # [tb, K]
    dot_dir = jnp.dot(pt, sel_dir, precision=hi,
                      preferred_element_type=f32)                    # [tb, K]
    t_dir = jnp.dot(t2, sel_dir, precision=hi,
                    preferred_element_type=f32)                      # [tb, K]

    mse = mse_sum * (1.0 / D)                                        # [tb, K]

    # pred direction norm^2 (first 3 channels) — tiny [tb, D] sweep.
    mask3 = (lax.broadcasted_iota(jnp.int32, (1, D), 1) < 3).astype(f32)
    pd_sq = jnp.sum(pred * pred * mask3, axis=-1, keepdims=True)     # [tb, 1]

    # Cosine similarity with F.normalize-style clamping, via EUP rsqrt:
    #   max(sqrt(x), eps) == sqrt(max(x, eps^2))  for x >= 0.
    inv_p = lax.rsqrt(jnp.maximum(pd_sq, _EPS * _EPS))               # [tb, 1]
    inv_t = lax.rsqrt(jnp.maximum(t_dir, _EPS * _EPS))               # [tb, K]
    cosine_sim = dot_dir * (inv_p * inv_t)                           # [tb, K]

    loss = mse + 0.5 * (1.0 - cosine_sim)                            # [tb, K]
    min_loss = jnp.min(loss, axis=1, keepdims=True)                  # [tb, 1]
    norm_loss = jnp.abs(1.0 - jnp.sqrt(pd_sq))                       # [tb, 1]
    val = min_loss + norm_loss                                       # [tb, 1]

    # Mask remainder rows of a partial last tile (contents undefined) with a
    # select (multiplying by 0 would not kill NaNs), then reduce to a scalar.
    row = pl.program_id(0) * tb + lax.broadcasted_iota(jnp.int32, (tb, 1), 0)
    val = jnp.where(row < B, val, 0.0)
    psum = jnp.sum(val)

    # Fully (8,128)-aligned, dense output block; only element (0,0) is the sum.
    r = lax.broadcasted_iota(jnp.int32, (8, 128), 0)
    c = lax.broadcasted_iota(jnp.int32, (8, 128), 1)
    out_ref[...] = jnp.where((r == 0) & (c == 0), psum, 0.0)


def _padded_bytes_per_row(K, D):
    """f32 bytes per batch row at padded (8,128) layout: double-buffered pred &
    target blocks plus ~6 [tb, K*D]-sized in-kernel temporaries."""
    kd_pad = _round_up(K * D, 128)
    d_pad = _round_up(D, 128)
    return 4 * (2 * kd_pad + 2 * d_pad + 6 * kd_pad)


def _vmem_capacity():
    try:
        return pltpu.get_tpu_info().vmem_capacity_bytes
    except Exception:
        return 64 * 1024 * 1024   # conservative fallback (v7x per-core VMEM)


def _pick_tile_b(B, K, D):
    """Largest batch tile (multiple of 8, or the whole batch) that fits VMEM,
    using padded sizes; force >=2 tiles for big batches (v7x megacore)."""
    bytes_per_row = _padded_bytes_per_row(K, D)
    budget = (_vmem_capacity() * 3) // 8          # headroom below the limit
    tb = min(max(budget // bytes_per_row, 8), _TB_MAX)
    tb = max(8, (tb // 8) * 8)
    if tb >= B:
        # Whole batch fits in one tile.  Split in two only when per-tile work
        # clearly dwarfs the ~0.35us per-grid-step overhead (v7x megacore win,
        # near no-op on single-TC v5e/v6e).
        if B >= 64 and B * K * D * 4 >= (1 << 19):
            return max(8, _round_up((B + 1) // 2, 8))
        return B
    return tb


def get_loss(pred, target, tb=None):
    """pred: [B, D], target: [B, K, D] -> scalar loss (float32)."""
    B, D = pred.shape
    Bt, K, Dt = target.shape
    assert B == Bt and D == Dt and D >= 3
    KD = K * D

    # Free, row-major-contiguous relayout: lane axis becomes K*D (dense tiles).
    target2d = target.reshape(B, KD)

    if tb is None:
        tb = _pick_tile_b(B, K, D)
    tb = int(min(tb, B))
    if tb != B:
        tb = max(8, (tb // 8) * 8)
    grid_b = pl.cdiv(B, tb)

    # Constant replication / segment-selection matrices (MXU reductions).
    eye_d = np.eye(D, dtype=np.float32)
    rep = np.tile(eye_d, (1, K))                                          # [D, KD]
    sel_full = np.kron(np.eye(K, dtype=np.float32),
                       np.ones((D, 1), dtype=np.float32))                 # [KD, K]
    sel_dir = np.kron(np.eye(K, dtype=np.float32),
                      (np.arange(D) < 3).astype(np.float32)[:, None])     # [KD, K]

    # Padding-aware VMEM limit with headroom (never above ~90% of physical).
    kd_pad = _round_up(KD, 128)
    d_pad = _round_up(D, 128)
    tile_bytes = (_round_up(tb, 8) * _padded_bytes_per_row(K, D)
                  + 4 * (d_pad * kd_pad + 2 * kd_pad * _round_up(K, 128))
                  + 2 * 8 * 128 * 4)
    vmem_cap = _vmem_capacity()
    vmem_limit = int(min(int(vmem_cap * 0.9),
                         max(32 * 1024 * 1024, 2 * tile_bytes)))

    cost = pl.CostEstimate(
        flops=int(2 * B * KD * (D + 3 * K) + 8 * B * KD + 16 * B * K),
        transcendentals=int(B * (K + 2)),
        bytes_accessed=int(4 * (B * KD + B * D + KD * (D + 2 * K)
                                + grid_b * 8 * 128)),
    )

    kernel = functools.partial(_get_loss_kernel, B=B)

    partials = pl.pallas_call(
        kernel,
        out_shape=jax.ShapeDtypeStruct((grid_b * 8, 128), jnp.float32),
        grid=(grid_b,),
        in_specs=[
            pl.BlockSpec((tb, D), lambda i: (i, 0)),
            pl.BlockSpec((tb, KD), lambda i: (i, 0)),
            pl.BlockSpec((D, KD), lambda i: (0, 0)),
            pl.BlockSpec((KD, K), lambda i: (0, 0)),
            pl.BlockSpec((KD, K), lambda i: (0, 0)),
        ],
        out_specs=pl.BlockSpec((8, 128), lambda i: (i, 0)),
        compiler_params=pltpu.CompilerParams(
            dimension_semantics=("parallel",),
            vmem_limit_bytes=vmem_limit,
        ),
        cost_estimate=cost,
    )(pred, target2d, jnp.asarray(rep), jnp.asarray(sel_full), jnp.asarray(sel_dir))

    # Tiny trailing reduction: one scalar partial sum per batch tile.
    return jnp.sum(partials) / B


def _reference(pred, target):
    # Pure-JAX reference mirroring the PyTorch forward, for sanity checking.
    diff = pred[:, None, :] - target
    mse = jnp.mean(diff * diff, axis=-1)
    pred_dir = pred[..., :3]
    target_dir = target[..., :3]
    p_n = jnp.linalg.norm(pred_dir, axis=-1)
    t_n = jnp.linalg.norm(target_dir, axis=-1)
    p_dirn = pred_dir / jnp.maximum(p_n, _EPS)[:, None]
    t_dirn = target_dir / jnp.maximum(t_n, _EPS)[..., None]
    cos = jnp.einsum("bd,bkd->bk", p_dirn, t_dirn)
    loss = mse + 0.5 * (1.0 - cos)
    min_loss = jnp.min(loss, axis=1)
    norm_loss = jnp.abs(1.0 - p_n)
    return jnp.mean(min_loss) + jnp.mean(norm_loss)


if __name__ == "__main__":
    key = jax.random.PRNGKey(0)

    # Case 1: multi-tile batch grid (B=64, tb=16 -> 4 tiles, megacore-parallel).
    k1, k2 = jax.random.split(key)
    B, K, D = 64, 8, 6
    pred = jax.random.normal(k1, (B, D), dtype=jnp.float32)
    target = jax.random.normal(k2, (B, K, D), dtype=jnp.float32)
    out = jax.block_until_ready(get_loss(pred, target, tb=16))
    ref = jax.block_until_ready(_reference(pred, target))
    assert jnp.allclose(out, ref, rtol=1e-4, atol=1e-5), (out, ref)

    # Case 2: remainder batch tile (B=20, tb=8 -> last tile only half valid,
    # exercises the in-kernel row masking of the fused partial sum).
    k3, k4 = jax.random.split(k2)
    B2, K2, D2 = 20, 5, 7
    pred2 = jax.random.normal(k3, (B2, D2), dtype=jnp.float32)
    target2 = jax.random.normal(k4, (B2, K2, D2), dtype=jnp.float32)
    out2 = jax.block_until_ready(get_loss(pred2, target2, tb=8))
    ref2 = jax.block_until_ready(_reference(pred2, target2))
    assert jnp.allclose(out2, ref2, rtol=1e-4, atol=1e-5), (out2, ref2)

    # Case 3: auto tile pick, single-tile path.
    k5, k6 = jax.random.split(k4)
    B3, K3, D3 = 16, 4, 5
    pred3 = jax.random.normal(k5, (B3, D3), dtype=jnp.float32)
    target3 = jax.random.normal(k6, (B3, K3, D3), dtype=jnp.float32)
    out3 = jax.block_until_ready(get_loss(pred3, target3))
    ref3 = jax.block_until_ready(_reference(pred3, target3))
    assert jnp.allclose(out3, ref3, rtol=1e-4, atol=1e-5), (out3, ref3)

    print("KERNEL_OK")
</pallas_src>

<mosaic_0001>
module attributes {stable_mosaic.version = 11 : i64} {
  func.func @_get_loss_kernel(%arg0: i32, %arg1: memref<16x6xf32, #tpu.memory_space<vmem>>, %arg2: memref<16x48xf32, #tpu.memory_space<vmem>>, %arg3: memref<6x48xf32, #tpu.memory_space<vmem>>, %arg4: memref<48x8xf32, #tpu.memory_space<vmem>>, %arg5: memref<48x8xf32, #tpu.memory_space<vmem>>, %arg6: memref<8x128xf32, #tpu.memory_space<vmem>>) attributes {dimension_semantics = [#tpu.dimension_semantics<parallel>], iteration_bounds = array<i64: 4>, scalar_prefetch = 0 : i64, scratch_operands = 0 : i64, tpu.core_type = #tpu.core_type<tc>, window_params = [{transform_indices = @transform_0, window_bounds = array<i64: 16, 6>}, {transform_indices = @transform_1, window_bounds = array<i64: 16, 48>}, {pipeline_mode = #tpu.pipeline_mode<synchronous>, transform_indices = @transform_2, window_bounds = array<i64: 6, 48>}, {pipeline_mode = #tpu.pipeline_mode<synchronous>, transform_indices = @transform_3, window_bounds = array<i64: 48, 8>}, {pipeline_mode = #tpu.pipeline_mode<synchronous>, transform_indices = @transform_4, window_bounds = array<i64: 48, 8>}, {transform_indices = @transform_5, window_bounds = array<i64: 8, 128>}]} {
    %c0 = arith.constant 0 : index
    %c0_0 = arith.constant 0 : index
    %0 = vector.load %arg1[%c0, %c0_0] : memref<16x6xf32, #tpu.memory_space<vmem>>, vector<16x6xf32>
    %c0_1 = arith.constant 0 : index
    %c0_2 = arith.constant 0 : index
    %1 = vector.load %arg2[%c0_1, %c0_2] : memref<16x48xf32, #tpu.memory_space<vmem>>, vector<16x48xf32>
    %c0_3 = arith.constant 0 : index
    %c0_4 = arith.constant 0 : index
    %2 = vector.load %arg3[%c0_3, %c0_4] : memref<6x48xf32, #tpu.memory_space<vmem>>, vector<6x48xf32>
    %c0_5 = arith.constant 0 : index
    %c0_6 = arith.constant 0 : index
    %3 = vector.load %arg4[%c0_5, %c0_6] : memref<48x8xf32, #tpu.memory_space<vmem>>, vector<48x8xf32>
    %c0_7 = arith.constant 0 : index
    %c0_8 = arith.constant 0 : index
    %4 = vector.load %arg5[%c0_7, %c0_8] : memref<48x8xf32, #tpu.memory_space<vmem>>, vector<48x8xf32>
    %cst = arith.constant dense<0.000000e+00> : vector<16x48xf32>
    %5 = tpu.matmul %0, %2, %cst {dimension_numbers = #tpu.dot_dimension_numbers<[1], [0], [0], [1], [0, 0, 1, 1], [], []>, precision = #tpu.contract_precision<fp32>} : vector<16x6xf32>, vector<6x48xf32>, vector<16x48xf32> -> vector<16x48xf32>
    %6 = arith.subf %5, %1 : vector<16x48xf32>
    %7 = arith.mulf %6, %6 : vector<16x48xf32>
    %8 = arith.mulf %5, %1 : vector<16x48xf32>
    %9 = arith.mulf %1, %1 : vector<16x48xf32>
    %cst_9 = arith.constant dense<0.000000e+00> : vector<16x8xf32>
    %10 = tpu.matmul %7, %3, %cst_9 {dimension_numbers = #tpu.dot_dimension_numbers<[1], [0], [0], [1], [0, 0, 1, 1], [], []>, precision = #tpu.contract_precision<fp32>} : vector<16x48xf32>, vector<48x8xf32>, vector<16x8xf32> -> vector<16x8xf32>
    %cst_10 = arith.constant dense<0.000000e+00> : vector<16x8xf32>
    %11 = tpu.matmul %8, %4, %cst_10 {dimension_numbers = #tpu.dot_dimension_numbers<[1], [0], [0], [1], [0, 0, 1, 1], [], []>, precision = #tpu.contract_precision<fp32>} : vector<16x48xf32>, vector<48x8xf32>, vector<16x8xf32> -> vector<16x8xf32>
    %cst_11 = arith.constant dense<0.000000e+00> : vector<16x8xf32>
    %12 = tpu.matmul %9, %4, %cst_11 {dimension_numbers = #tpu.dot_dimension_numbers<[1], [0], [0], [1], [0, 0, 1, 1], [], []>, precision = #tpu.contract_precision<fp32>} : vector<16x48xf32>, vector<48x8xf32>, vector<16x8xf32> -> vector<16x8xf32>
    %cst_12 = arith.constant 0.166666672 : f32
    %13 = vector.broadcast %cst_12 : f32 to vector<16x8xf32>
    %14 = arith.mulf %10, %13 : vector<16x8xf32>
    %15 = tpu.iota {dimensions = array<i32: 1>} : vector<1x6xi32>
    %c3_i32 = arith.constant 3 : i32
    %16 = vector.broadcast %c3_i32 : i32 to vector<1x6xi32>
    %17 = arith.cmpi slt, %15, %16 : vector<1x6xi32>
    %18 = arith.extui %17 : vector<1x6xi1> to vector<1x6xi32>
    %19 = arith.sitofp %18 : vector<1x6xi32> to vector<1x6xf32>
    %20 = arith.mulf %0, %0 : vector<16x6xf32>
    %21 = vector.broadcast %19 : vector<1x6xf32> to vector<16x6xf32>
    %22 = arith.mulf %20, %21 : vector<16x6xf32>
    %cst_13 = arith.constant dense<0.000000e+00> : vector<16xf32>
    %23 = vector.multi_reduction <add>, %22, %cst_13 [1] : vector<16x6xf32> to vector<16xf32>
    %24 = vector.shape_cast %23 : vector<16xf32> to vector<16x1xf32>
    %cst_14 = arith.constant 1.000000e-24 : f32
    %25 = vector.broadcast %cst_14 : f32 to vector<16x1xf32>
    %26 = arith.maximumf %24, %25 : vector<16x1xf32>
    %27 = math.rsqrt %26 : vector<16x1xf32>
    %cst_15 = arith.constant 1.000000e-24 : f32
    %28 = vector.broadcast %cst_15 : f32 to vector<16x8xf32>
    %29 = arith.maximumf %12, %28 : vector<16x8xf32>
    %30 = math.rsqrt %29 : vector<16x8xf32>
    %31 = vector.broadcast %27 : vector<16x1xf32> to vector<16x8xf32>
    %32 = arith.mulf %31, %30 : vector<16x8xf32>
    %33 = arith.mulf %11, %32 : vector<16x8xf32>
    %cst_16 = arith.constant 1.000000e+00 : f32
    %34 = vector.broadcast %cst_16 : f32 to vector<16x8xf32>
    %35 = arith.subf %34, %33 : vector<16x8xf32>
    %cst_17 = arith.constant 5.000000e-01 : f32
    %36 = vector.broadcast %cst_17 : f32 to vector<16x8xf32>
    %37 = arith.mulf %36, %35 : vector<16x8xf32>
    %38 = arith.addf %14, %37 : vector<16x8xf32>
    %cst_18 = arith.constant dense<0x7F800000> : vector<16xf32>
    %39 = vector.multi_reduction <minimumf>, %38, %cst_18 [1] : vector<16x8xf32> to vector<16xf32>
    %40 = vector.shape_cast %39 : vector<16xf32> to vector<16x1xf32>
    %41 = math.sqrt %24 : vector<16x1xf32>
    %cst_19 = arith.constant 1.000000e+00 : f32
    %42 = vector.broadcast %cst_19 : f32 to vector<16x1xf32>
    %43 = arith.subf %42, %41 : vector<16x1xf32>
    %44 = math.absf %43 : vector<16x1xf32>
    %45 = arith.addf %40, %44 : vector<16x1xf32>
    %c16_i32 = arith.constant 16 : i32
    %46 = arith.muli %arg0, %c16_i32 : i32
    %47 = tpu.iota {dimensions = array<i32: 0>} : vector<16x1xi32>
    %48 = vector.broadcast %46 : i32 to vector<16x1xi32>
    %49 = arith.addi %48, %47 : vector<16x1xi32>
    %c64_i32 = arith.constant 64 : i32
    %50 = vector.broadcast %c64_i32 : i32 to vector<16x1xi32>
    %51 = arith.cmpi slt, %49, %50 : vector<16x1xi32>
    %cst_20 = arith.constant 0.000000e+00 : f32
    %52 = vector.broadcast %cst_20 : f32 to vector<16x1xf32>
    %53 = arith.select %51, %45, %52 : vector<16x1xi1>, vector<16x1xf32>
    %54 = vector.shape_cast %53 : vector<16x1xf32> to vector<1x16x1xf32>
    %cst_21 = arith.constant dense<0.000000e+00> : vector<1xf32>
    %55 = vector.multi_reduction <add>, %54, %cst_21 [1, 2] : vector<1x16x1xf32> to vector<1xf32>
    %56 = vector.shape_cast %55 : vector<1xf32> to vector<1x1x1xf32>
    %57 = vector.extract %56[0, 0, 0] : f32 from vector<1x1x1xf32>
    %58 = tpu.iota {dimensions = array<i32: 0>} : vector<8x128xi32>
    %59 = tpu.iota {dimensions = array<i32: 1>} : vector<8x128xi32>
    %c0_i32 = arith.constant 0 : i32
    %60 = vector.broadcast %c0_i32 : i32 to vector<8x128xi32>
    %61 = arith.cmpi eq, %58, %60 : vector<8x128xi32>
    %c0_i32_22 = arith.constant 0 : i32
    %62 = vector.broadcast %c0_i32_22 : i32 to vector<8x128xi32>
    %63 = arith.cmpi eq, %59, %62 : vector<8x128xi32>
    %64 = arith.andi %61, %63 : vector<8x128xi1>
    %cst_23 = arith.constant 0.000000e+00 : f32
    %65 = vector.broadcast %57 : f32 to vector<8x128xf32>
    %66 = vector.broadcast %cst_23 : f32 to vector<8x128xf32>
    %67 = arith.select %64, %65, %66 : vector<8x128xi1>, vector<8x128xf32>
    %c0_24 = arith.constant 0 : index
    %c0_25 = arith.constant 0 : index
    %68 = vector.load %arg6[%c0_24, %c0_25] : memref<8x128xf32, #tpu.memory_space<vmem>>, vector<8x128xf32>
    tpu.vector_store %arg6[%c0_24, %c0_25], %67 {strides = array<i32>} : memref<8x128xf32, #tpu.memory_space<vmem>>, vector<8x128xf32>,
    return
  }
  func.func @transform_0(%arg0: i32) -> (i32, i32) {
    %c0_i32 = arith.constant 0 : i32
    %c0_i32_0 = arith.constant 0 : i32
    return %arg0, %c0_i32 : i32, i32
  }
  func.func @transform_1(%arg0: i32) -> (i32, i32) {
    %c0_i32 = arith.constant 0 : i32
    %c0_i32_0 = arith.constant 0 : i32
    return %arg0, %c0_i32 : i32, i32
  }
  func.func @transform_2(%arg0: i32) -> (i32, i32) {
    %c0_i32 = arith.constant 0 : i32
    %c0_i32_0 = arith.constant 0 : i32
    %c0_i32_1 = arith.constant 0 : i32
    return %c0_i32, %c0_i32_0 : i32, i32
  }
  func.func @transform_3(%arg0: i32) -> (i32, i32) {
    %c0_i32 = arith.constant 0 : i32
    %c0_i32_0 = arith.constant 0 : i32
    %c0_i32_1 = arith.constant 0 : i32
    return %c0_i32, %c0_i32_0 : i32, i32
  }
  func.func @transform_4(%arg0: i32) -> (i32, i32) {
    %c0_i32 = arith.constant 0 : i32
    %c0_i32_0 = arith.constant 0 : i32
    %c0_i32_1 = arith.constant 0 : i32
    return %c0_i32, %c0_i32_0 : i32, i32
  }
  func.func @transform_5(%arg0: i32) -> (i32, i32) {
    %c0_i32 = arith.constant 0 : i32
    %c0_i32_0 = arith.constant 0 : i32
    return %arg0, %c0_i32 : i32, i32
  }
}

</mosaic_0001>

<llo_original>
// kernel: tpu_custom_call.1
$region0: #{tpu_custom_call.1}
  #allocation0 [shape = 'u32[]', space=smem, size = 0x4, offset = 0x4, fixed_abs, tag = 'smem constant byte address 0x4 - core index']
  #allocation1 [shape = 'u32[144,128]{1,0:T(1,128)}', space=vmem, size = 0x12000, scoped, tag = 'internal scratch']
  %s0 = inlined_call_operand.vmem [shape: f32[64,6], index: 0, kind: input, shape index: {}]
  %s1 = inlined_call_operand.vmem [shape: f32[64,48], index: 1, kind: input, shape index: {}]
  %s2 = inlined_call_operand.vmem [shape: f32[6,48], index: 2, kind: input, shape index: {}]
  %s3 = inlined_call_operand.vmem [shape: f32[48,8], index: 3, kind: input, shape index: {}]
  %s4 = inlined_call_operand.vmem [shape: f32[48,8], index: 4, kind: input, shape index: {}]
  %s5 = inlined_call_operand.hbm [shape: f32[32,128], index: 5, kind: output, shape index: {}]
  %s6 = sld [smem:[#allocation0]]
  $region53: #{tpu_custom_call.1} parent=0
    _
  %s8 = ssub.s32 1, %s6
  %s9 = scalar_select 0, %s8, %s6
  $region1: #{tpu_custom_call.1} parent=0
    #allocation2 [shape = 'u8[8192]{0}', space=vmem, size = 0x2000, scoped, tag = 'output window, operand 0']
    #allocation3 [shape = 's32[2]{0}', space=sflag, size = 0x8, scoped, tag = 'scoped memory for tpu_custom_call.1']
    %10 = vsyncpa [#allocation3], 0
    %s11 = scalar_lea.sflag [#allocation3], 1
    %12 = vsyncpa %s11, 0
    loop: start=0, step=1, limit=6
    $region2: #{tpu_custom_call.1} parent=1 // loop_pre_header
      _
    $region3: #{tpu_custom_call.1} parent=1 // loop_header
      %s14 = sphi 0, %s18
      %p15 = scmp.ge.s32.totalorder %s14, 6
      %s24 = sphi 0, %s26
      %s27 = sphi 0, %s24
      %s28 = sphi 0, %s27
      %s44 = sphi 0, %s28
      %s50 = sphi 0, %s52
      %s53 = sphi 0, %s50
      %s54 = sphi 0, %s53
      %s70 = sphi 0, %s54
      %s74 = sphi 0, %s74
      %s76 = sphi 0, %s74
      %s77 = sphi 0, %s76
      %s91 = sphi 0, %s77
      %s95 = sphi 0, %s95
      %s97 = sphi 0, %s95
      %s98 = sphi 0, %s97
      %s112 = sphi 0, %s98
      %s116 = sphi 0, %s116
      %s118 = sphi 0, %s116
      %s119 = sphi 0, %s118
      %s133 = sphi 0, %s119
      %s139 = sphi 0, %s141
      %s142 = sphi 0, %s139
      %s143 = sphi 0, %s142
      %s159 = sphi 0, %s143
    $region4: #{tpu_custom_call.1} parent=1 // loop_header_branch
      %17 = sbr.rel (%p15) target = $region8
    $region5: #{tpu_custom_call.1} parent=1 // loop_body
      %s19 = ssub.s32 %s14, 1
      %s20 = ssub.s32 %s14, 2
      %s21 = sadd.s32 %s14, 1
      %s22 = ssub.s32 %s14, %s21
      %p23 = scmp.eq.s32.totalorder %s22, 0
      %s25 = sadd.s32 %s24, 1
      %s26 = scalar_select %p23, %s24, %s25
      %p29 = pneg %p23
      %p30 = scmp.eq.s32.totalorder %s14, 3
      %p31 = por %p29, %p30
      %p32 = scmp.ne.s32.totalorder %s24, %s27
      %p33 = scmp.eq.s32.totalorder %s14, 0
      %p34 = por %p32, %p33
      %p35 = scmp.ne.s32.totalorder %s24, %s27
      %p36 = scmp.eq.s32.totalorder %s19, 3
      %p37 = por %p35, %p36
      %p38 = scmp.ne.s32.totalorder %s27, %s28
      %p39 = scmp.eq.s32.totalorder %s19, 0
      %p40 = por %p38, %p39
      %p41 = scmp.ne.s32.totalorder %s27, %s28
      %p42 = scmp.eq.s32.totalorder %s20, 3
      %p43 = por %p41, %p42
      %p45 = scmp.ne.s32.totalorder %s28, %s44
      %p46 = scmp.eq.s32.totalorder %s20, 0
      %p47 = por %p45, %p46
      %s48 = ssub.s32 %s14, %s21
      %p49 = scmp.eq.s32.totalorder %s48, 0
      %s51 = sadd.s32 %s50, 1
      %s52 = scalar_select %p49, %s50, %s51
      %p55 = pneg %p49
      %p56 = scmp.eq.s32.totalorder %s14, 3
      %p57 = por %p55, %p56
      %p58 = scmp.ne.s32.totalorder %s50, %s53
      %p59 = scmp.eq.s32.totalorder %s14, 0
      %p60 = por %p58, %p59
      %p61 = scmp.ne.s32.totalorder %s50, %s53
      %p62 = scmp.eq.s32.totalorder %s19, 3
      %p63 = por %p61, %p62
      %p64 = scmp.ne.s32.totalorder %s53, %s54
      %p65 = scmp.eq.s32.totalorder %s19, 0
      %p66 = por %p64, %p65
      %p67 = scmp.ne.s32.totalorder %s53, %s54
      %p68 = scmp.eq.s32.totalorder %s20, 3
      %p69 = por %p67, %p68
      %p71 = scmp.ne.s32.totalorder %s54, %s70
      %p72 = scmp.eq.s32.totalorder %s20, 0
      %p73 = por %p71, %p72
      %s75 = sadd.s32 %s74, 1
      %p78 = scmp.eq.s32.totalorder %s14, 3
      %p79 = scmp.ne.s32.totalorder %s74, %s76
      %p80 = scmp.eq.s32.totalorder %s14, 0
      %p81 = por %p79, %p80
      %p82 = scmp.ne.s32.totalorder %s74, %s76
      %p83 = scmp.eq.s32.totalorder %s19, 3
      %p84 = por %p82, %p83
      %p85 = scmp.ne.s32.totalorder %s76, %s77
      %p86 = scmp.eq.s32.totalorder %s19, 0
      %p87 = por %p85, %p86
      %p88 = scmp.ne.s32.totalorder %s76, %s77
      %p89 = scmp.eq.s32.totalorder %s20, 3
      %p90 = por %p88, %p89
      %p92 = scmp.ne.s32.totalorder %s77, %s91
      %p93 = scmp.eq.s32.totalorder %s20, 0
      %p94 = por %p92, %p93
      %s96 = sadd.s32 %s95, 1
      %p99 = scmp.eq.s32.totalorder %s14, 3
      %p100 = scmp.ne.s32.totalorder %s95, %s97
      %p101 = scmp.eq.s32.totalorder %s14, 0
      %p102 = por %p100, %p101
      %p103 = scmp.ne.s32.totalorder %s95, %s97
      %p104 = scmp.eq.s32.totalorder %s19, 3
      %p105 = por %p103, %p104
      %p106 = scmp.ne.s32.totalorder %s97, %s98
      %p107 = scmp.eq.s32.totalorder %s19, 0
      %p108 = por %p106, %p107
      %p109 = scmp.ne.s32.totalorder %s97, %s98
      %p110 = scmp.eq.s32.totalorder %s20, 3
      %p111 = por %p109, %p110
      %p113 = scmp.ne.s32.totalorder %s98, %s112
      %p114 = scmp.eq.s32.totalorder %s20, 0
      %p115 = por %p113, %p114
      %s117 = sadd.s32 %s116, 1
      %p120 = scmp.eq.s32.totalorder %s14, 3
      %p121 = scmp.ne.s32.totalorder %s116, %s118
      %p122 = scmp.eq.s32.totalorder %s14, 0
      %p123 = por %p121, %p122
      %p124 = scmp.ne.s32.totalorder %s116, %s118
      %p125 = scmp.eq.s32.totalorder %s19, 3
      %p126 = por %p124, %p125
      %p127 = scmp.ne.s32.totalorder %s118, %s119
      %p128 = scmp.eq.s32.totalorder %s19, 0
      %p129 = por %p127, %p128
      %p130 = scmp.ne.s32.totalorder %s118, %s119
      %p131 = scmp.eq.s32.totalorder %s20, 3
      %p132 = por %p130, %p131
      %p134 = scmp.ne.s32.totalorder %s119, %s133
      %p135 = scmp.eq.s32.totalorder %s20, 0
      %p136 = por %p134, %p135
      %s137 = ssub.s32 %s14, %s21
      %p138 = scmp.eq.s32.totalorder %s137, 0
      %s140 = sadd.s32 %s139, 1
      %s141 = scalar_select %p138, %s139, %s140
      %p144 = pneg %p138
      %p145 = scmp.eq.s32.totalorder %s14, 3
      %p146 = por %p144, %p145
      %p147 = scmp.ne.s32.totalorder %s139, %s142
      %p148 = scmp.eq.s32.totalorder %s14, 0
      %p149 = por %p147, %p148
      %p150 = scmp.ne.s32.totalorder %s139, %s142
      %p151 = scmp.eq.s32.totalorder %s19, 3
      %p152 = por %p150, %p151
      %p153 = scmp.ne.s32.totalorder %s142, %s143
      %p154 = scmp.eq.s32.totalorder %s19, 0
      %p155 = por %p153, %p154
      %p156 = scmp.ne.s32.totalorder %s142, %s143
      %p157 = scmp.eq.s32.totalorder %s20, 3
      %p158 = por %p156, %p157
      %p160 = scmp.ne.s32.totalorder %s143, %s159
      %p161 = scmp.eq.s32.totalorder %s20, 0
      %p162 = por %p160, %p161
      %p163 = scmp.le.s32.totalorder 1, %s14
      %p164 = scmp.lt.s32.totalorder %s14, 5
      %p165 = pnand %p163, %p164
      %p166 = pneg %p165
      // Predicated region
      $region9: #{tpu_custom_call.1} parent=5 // pred_check
        _
      $region10: #{tpu_custom_call.1} parent=5 // pred_check_branch
        %168 = sbr.rel (%p165) target = $region12
      $region11: #{tpu_custom_call.1} parent=5 // pred_region
        %s169 = ssub.s32 %s14, 1
        // Predicated region
        $region13: #{tpu_custom_call.1} parent=11 // pred_check
          %p170 = pneg %p87
        $region14: #{tpu_custom_call.1} parent=11 // pred_check_branch
          %172 = sbr.rel (%p170) target = $region16
        $region15: #{tpu_custom_call.1} parent=11 // pred_region
          _
        $region16: #{tpu_custom_call.1} parent=11 // pred_fallthru
          _
        // Predicated region
        $region17: #{tpu_custom_call.1} parent=11 // pred_check
          %p173 = pneg %p108
        $region18: #{tpu_custom_call.1} parent=11 // pred_check_branch
          %175 = sbr.rel (%p173) target = $region20
        $region19: #{tpu_custom_call.1} parent=11 // pred_region
          _
        $region20: #{tpu_custom_call.1} parent=11 // pred_fallthru
          _
        // Predicated region
        $region21: #{tpu_custom_call.1} parent=11 // pred_check
          %p176 = pneg %p129
        $region22: #{tpu_custom_call.1} parent=11 // pred_check_branch
          %178 = sbr.rel (%p176) target = $region24
        $region23: #{tpu_custom_call.1} parent=11 // pred_region
          _
        $region24: #{tpu_custom_call.1} parent=11 // pred_fallthru
          _
      $region12: #{tpu_custom_call.1} parent=5 // pred_fallthru
        _
      %p179 = scmp.lt.s32.totalorder %s14, 4
      // Predicated region
      $region25: #{tpu_custom_call.1} parent=5 // pred_check
        %p180 = pneg %p179
      $region26: #{tpu_custom_call.1} parent=5 // pred_check_branch
        %182 = sbr.rel (%p180) target = $region28
      $region27: #{tpu_custom_call.1} parent=5 // pred_region
        // Predicated region
        $region29: #{tpu_custom_call.1} parent=27 // pred_check
          %p183 = pneg %p34
        $region30: #{tpu_custom_call.1} parent=27 // pred_check_branch
          %185 = sbr.rel (%p183) target = $region32
        $region31: #{tpu_custom_call.1} parent=27 // pred_region
          %s186 = smul.u32 2, %s14
          %p187 = scmp.lt.s32.totalorder %s186, 7
          %s188 = scalar_select %p187, %s186, 7
          %s189 = smul.addr %s188, 8
          %s190 = scalar_lea.vmem %s0, %s189
          %s191 = smul.u32 2, %s14
        $region32: #{tpu_custom_call.1} parent=27 // pred_fallthru
          _
        // Predicated region
        $region33: #{tpu_custom_call.1} parent=27 // pred_check
          %p192 = pneg %p60
        $region34: #{tpu_custom_call.1} parent=27 // pred_check_branch
          %194 = sbr.rel (%p192) target = $region36
        $region35: #{tpu_custom_call.1} parent=27 // pred_region
          %s195 = smul.u32 2, %s14
          %p196 = scmp.lt.s32.totalorder %s195, 7
          %s197 = scalar_select %p196, %s195, 7
          %s198 = smul.addr %s197, 8
          %s199 = scalar_lea.vmem %s1, %s198
          %s200 = smul.u32 2, %s14
        $region36: #{tpu_custom_call.1} parent=27 // pred_fallthru
          _
      $region28: #{tpu_custom_call.1} parent=5 // pred_fallthru
        _
      %p201 = scmp.le.s32.totalorder 1, %s14
      %p202 = scmp.lt.s32.totalorder %s14, 5
      %p203 = pnand %p201, %p202
      %p204 = pneg %p203
      // Predicated region
      $region37: #{tpu_custom_call.1} parent=5 // pred_check
        _
      $region38: #{tpu_custom_call.1} parent=5 // pred_check_branch
        %206 = sbr.rel (%p203) target = $region40
      $region39: #{tpu_custom_call.1} parent=5 // pred_region
        %s207 = ssub.s32 %s14, 1
        %s208 = smul.u32 2, %s19
        %p209 = scmp.lt.s32.totalorder %s208, 7
        %s210 = scalar_select %p209, %s208, 7
        %s211 = smul.addr %s210, 8
        %s212 = scalar_lea.vmem %s0, %s211
        %p213 = pneg %p40
        %p214 = pneg %p37
        %s215 = smul.u32 2, %s19
        %p216 = scmp.lt.s32.totalorder %s215, 7
        %s217 = scalar_select %p216, %s215, 7
        %s218 = smul.addr %s217, 8
        %s219 = scalar_lea.vmem %s1, %s218
        %p220 = pneg %p66
        %p221 = pneg %p63
        %p222 = pneg %p87
        %p223 = pneg %p84
        %p224 = pneg %p108
        %p225 = pneg %p105
        %p226 = pneg %p129
        %p227 = pneg %p126
        %p228 = pneg %p155
        %p229 = pneg %p152
        %s230 = sand.u32 %s142, 1
        %s231 = scalar_lea.sflag [#allocation3], %s230
        %s232 = sand.u32 %s142, 1
        %s233 = smul.addr %s232, 8
        %s234 = scalar_lea.vmem [#allocation2], %s233
        %s235 = smul.u32 2, %s19
        %p236 = scmp.lt.s32.totalorder %s235, 7
        %s237 = scalar_select %p236, %s235, 7
        %s238 = smul.addr %s237, 8
        %s239 = scalar_lea.vmem %s0, %s238
        %s240 = smul.u32 2, %s19
        %s241 = smul.u32 2, %s19
        %p242 = scmp.lt.s32.totalorder %s241, 7
        %s243 = scalar_select %p242, %s241, 7
        %s244 = smul.addr %s243, 8
        %s245 = scalar_lea.vmem %s1, %s244
        %s246 = smul.u32 2, %s19
        %v247 = vld [vmem:[%s239] sm:$0xff]
        %v248 = vld [vmem:[%s239 + $0x8] sm:$0xff]
        %v249 = vld [vmem:[%s245] sm:$0xff]
        %v250 = vld [vmem:[%s245 + $0x8] sm:$0xff]
        %v251 = vld [vmem:[%s2] sm:$0x3f]
        %v252 = vld [vmem:[%s3] sm:$0xff]
        %v253 = vld [vmem:[%s3 + $0x8] sm:$0xff]
        %v254 = vld [vmem:[%s3 + $0x10] sm:$0xff]
        %v255 = vld [vmem:[%s3 + $0x18] sm:$0xff]
        %v256 = vld [vmem:[%s3 + $0x20] sm:$0xff]
        %v257 = vld [vmem:[%s3 + $0x28] sm:$0xff]
        %v258 = vld [vmem:[%s4] sm:$0xff]
        %v259 = vld [vmem:[%s4 + $0x8] sm:$0xff]
        %v260 = vld [vmem:[%s4 + $0x10] sm:$0xff]
        %v261 = vld [vmem:[%s4 + $0x18] sm:$0xff]
        %v262 = vld [vmem:[%s4 + $0x20] sm:$0xff]
        %v263 = vld [vmem:[%s4 + $0x28] sm:$0xff]
        %vm264 = vcmask 48128
        %v266 = vsel %vm264, %v247, 0
        %v269 = vsel %vm264, %v248, 0
        %vm271 = vcmask 1045504
        %v273 = vsel %vm271, %v251, 0
        %275 = vmatprep.subr.mxu0 0.0
        %v276 = vand.u32 %v273, 4294901760
        %277 = vmatpush1.msra.mxu0 %v276
        %278 = vmatprep.subr.mxu0 0.0
        %279 = vmatpush1.msra.mxu0 0.0
        %280 = vmatprep.subr.mxu0 0.0
        %281 = vmatpush1.msra.mxu0 0.0
        %282 = vmatprep.subr.mxu0 0.0
        %283 = vmatpush1.msra.mxu0 0.0
        %284 = vmatprep.subr.mxu0 0.0
        %285 = vmatpush1.msra.mxu0 0.0
        %286 = vmatprep.subr.mxu0 0.0
        %287 = vmatpush1.msra.mxu0 0.0
        %288 = vmatprep.subr.mxu0 0.0
        %289 = vmatpush1.msra.mxu0 0.0
        %290 = vmatprep.subr.mxu0 0.0
        %291 = vmatpush1.msra.mxu0 0.0
        %292 = vmatprep.subr.mxu0 0.0
        %293 = vmatpush1.msra.mxu0 0.0
        %294 = vmatprep.subr.mxu0 0.0
        %295 = vmatpush1.msra.mxu0 0.0
        %296 = vmatprep.subr.mxu0 0.0
        %297 = vmatpush1.msra.mxu0 0.0
        %298 = vmatprep.subr.mxu0 0.0
        %299 = vmatpush1.msra.mxu0 0.0
        %300 = vmatprep.subr.mxu0 0.0
        %301 = vmatpush1.msra.mxu0 0.0
        %302 = vmatprep.subr.mxu0 0.0
        %303 = vmatpush1.msra.mxu0 0.0
        %304 = vmatprep.subr.mxu0 0.0
        %305 = vmatpush1.msra.mxu0 0.0
        %306 = vmatprep.subr.mxu0 0.0
        %307 = vmatpush1.msra.mxu0 0.0
        %308 = vmatprep.subr.mxu0 0.0
        %309 = vmatpush1.msra.mxu0 0.0
        %310 = vmatprep.subr.mxu0 0.0
        %311 = vmatpush1.msra.mxu0 0.0
        %312 = vmatprep.subr.mxu0 0.0
        %313 = vmatpush1.msra.mxu0 0.0
        %314 = vmatprep.subr.mxu0 0.0
        %315 = vmatpush1.msra.mxu0 0.0
        %316 = vmatprep.subr.mxu0 0.0
        %317 = vmatpush1.msra.mxu0 0.0
        %318 = vmatprep.subr.mxu0 0.0
        %319 = vmatpush1.msra.mxu0 0.0
        %320 = vmatprep.subr.mxu0 0.0
        %321 = vmatpush1.msra.mxu0 0.0
        %322 = vmatprep.subr.mxu0 0.0
        %323 = vmatpush1.msra.mxu0 0.0
        %324 = vmatprep.subr.mxu0 0.0
        %325 = vmatpush1.msra.mxu0 0.0
        %326 = vmatprep.subr.mxu0 0.0
        %327 = vmatpush1.msra.mxu0 0.0
        %328 = vmatprep.subr.mxu0 0.0
        %329 = vmatpush1.msra.mxu0 0.0
        %330 = vmatprep.subr.mxu0 0.0
        %331 = vmatpush1.msra.mxu0 0.0
        %332 = vmatprep.subr.mxu0 0.0
        %333 = vmatpush1.msra.mxu0 0.0
        %334 = vmatprep.subr.mxu0 0.0
        %335 = vmatpush1.msra.mxu0 0.0
        %336 = vmatprep.subr.mxu0 0.0
        %337 = vmatpush1.msra.mxu0 0.0
        %338 = vmatprep.subr.mxu0 0.0
        %339 = vmatpush1.msra.mxu0 0.0
        %340 = vmatprep.mubr.f32.mxu0 0.0
        %v341 = vand.u32 %v266, 4294901760
        %v342 = vsub.f32 %v266, %v341
        %v343 = vand.u32 %v342, 4294901760
        %v344 = vsub.f32 %v342, %v343
        %v345 = vand.u32 %v344, 4294901760
        %346 = vmatmul.mubr.f32.gmra.mrb[0].mxu0 %v345
        %v347 = vpop.f32.mrb[0].mxu0
        %v348 = vadd.f32 0.0, %v347
        %v349 = vpop.f32.mrb[0].mxu0
        %350 = vmatprep.mubr.f32.mxu0 0.0
        %v351 = vand.u32 %v269, 4294901760
        %v352 = vsub.f32 %v269, %v351
        %v353 = vand.u32 %v352, 4294901760
        %v354 = vsub.f32 %v352, %v353
        %v355 = vand.u32 %v354, 4294901760
        %356 = vmatmul.mubr.f32.gmra.mrb[0].mxu0 %v355
        %v357 = vpop.f32.mrb[0].mxu0
        %v358 = vadd.f32 0.0, %v357
        %v359 = vpop.f32.mrb[0].mxu0
        %360 = vdwg.mxu0
        %361 = vmatprep.subr.mxu0 0.0
        %v362 = vand.u32 %v273, 4294901760
        %v363 = vsub.f32 %v273, %v362
        %v364 = vand.u32 %v363, 4294901760
        %v365 = vsub.f32 %v363, %v364
        %v366 = vand.u32 %v365, 4294901760
        %367 = vmatpush1.msra.mxu0 %v366
        %368 = vmatprep.subr.mxu0 0.0
        %369 = vmatpush1.msra.mxu0 0.0
        %370 = vmatprep.subr.mxu0 0.0
        %371 = vmatpush1.msra.mxu0 0.0
        %372 = vmatprep.subr.mxu0 0.0
        %373 = vmatpush1.msra.mxu0 0.0
        %374 = vmatprep.subr.mxu0 0.0
        %375 = vmatpush1.msra.mxu0 0.0
        %376 = vmatprep.subr.mxu0 0.0
        %377 = vmatpush1.msra.mxu0 0.0
        %378 = vmatprep.subr.mxu0 0.0
        %379 = vmatpush1.msra.mxu0 0.0
        %380 = vmatprep.subr.mxu0 0.0
        %381 = vmatpush1.msra.mxu0 0.0
        %382 = vmatprep.subr.mxu0 0.0
        %383 = vmatpush1.msra.mxu0 0.0
        %384 = vmatprep.subr.mxu0 0.0
        %385 = vmatpush1.msra.mxu0 0.0
        %386 = vmatprep.subr.mxu0 0.0
        %387 = vmatpush1.msra.mxu0 0.0
        %388 = vmatprep.subr.mxu0 0.0
        %389 = vmatpush1.msra.mxu0 0.0
        %390 = vmatprep.subr.mxu0 0.0
        %391 = vmatpush1.msra.mxu0 0.0
        %392 = vmatprep.subr.mxu0 0.0
        %393 = vmatpush1.msra.mxu0 0.0
        %394 = vmatprep.subr.mxu0 0.0
        %395 = vmatpush1.msra.mxu0 0.0
        %396 = vmatprep.subr.mxu0 0.0
        %397 = vmatpush1.msra.mxu0 0.0
        %398 = vmatprep.subr.mxu0 0.0
        %399 = vmatpush1.msra.mxu0 0.0
        %400 = vmatprep.subr.mxu0 0.0
        %401 = vmatpush1.msra.mxu0 0.0
        %402 = vmatprep.subr.mxu0 0.0
        %403 = vmatpush1.msra.mxu0 0.0
        %404 = vmatprep.subr.mxu0 0.0
        %405 = vmatpush1.msra.mxu0 0.0
        %406 = vmatprep.subr.mxu0 0.0
        %407 = vmatpush1.msra.mxu0 0.0
        %408 = vmatprep.subr.mxu0 0.0
        %409 = vmatpush1.msra.mxu0 0.0
        %410 = vmatprep.subr.mxu0 0.0
        %411 = vmatpush1.msra.mxu0 0.0
        %412 = vmatprep.subr.mxu0 0.0
        %413 = vmatpush1.msra.mxu0 0.0
        %414 = vmatprep.subr.mxu0 0.0
        %415 = vmatpush1.msra.mxu0 0.0
        %416 = vmatprep.subr.mxu0 0.0
        %417 = vmatpush1.msra.mxu0 0.0
        %418 = vmatprep.subr.mxu0 0.0
        %419 = vmatpush1.msra.mxu0 0.0
        %420 = vmatprep.subr.mxu0 0.0
        %421 = vmatpush1.msra.mxu0 0.0
        %422 = vmatprep.subr.mxu0 0.0
        %423 = vmatpush1.msra.mxu0 0.0
        %424 = vmatprep.subr.mxu0 0.0
        %425 = vmatpush1.msra.mxu0 0.0
        %426 = vmatprep.subr.mxu0 0.0
        %427 = vmatpush1.msra.mxu0 0.0
        %428 = vmatprep.subr.mxu0 0.0
        %429 = vmatpush1.msra.mxu0 0.0
        %430 = vmatprep.mubr.f32.mxu0 0.0
        %v431 = vand.u32 %v266, 4294901760
        %432 = vmatmul.mubr.f32.gmra.mrb[0].mxu0 %v431
        %v433 = vpop.f32.mrb[0].mxu0
        %v434 = vadd.f32 %v348, %v433
        %v435 = vpop.f32.mrb[0].mxu0
        %436 = vmatprep.mubr.f32.mxu0 0.0
        %v437 = vand.u32 %v269, 4294901760
        %438 = vmatmul.mubr.f32.gmra.mrb[0].mxu0 %v437
        %v439 = vpop.f32.mrb[0].mxu0
        %v440 = vadd.f32 %v358, %v439
        %v441 = vpop.f32.mrb[0].mxu0
        %442 = vdwg.mxu0
        %443 = vmatprep.subr.mxu0 0.0
        %v444 = vand.u32 %v273, 4294901760
        %v445 = vsub.f32 %v273, %v444
        %446 = vmatpush1.msra.mxu0 %v445
        %447 = vmatprep.subr.mxu0 0.0
        %448 = vmatpush1.msra.mxu0 0.0
        %449 = vmatprep.subr.mxu0 0.0
        %450 = vmatpush1.msra.mxu0 0.0
        %451 = vmatprep.subr.mxu0 0.0
        %452 = vmatpush1.msra.mxu0 0.0
        %453 = vmatprep.subr.mxu0 0.0
        %454 = vmatpush1.msra.mxu0 0.0
        %455 = vmatprep.subr.mxu0 0.0
        %456 = vmatpush1.msra.mxu0 0.0
        %457 = vmatprep.subr.mxu0 0.0
        %458 = vmatpush1.msra.mxu0 0.0
        %459 = vmatprep.subr.mxu0 0.0
        %460 = vmatpush1.msra.mxu0 0.0
        %461 = vmatprep.subr.mxu0 0.0
        %462 = vmatpush1.msra.mxu0 0.0
        %463 = vmatprep.subr.mxu0 0.0
        %464 = vmatpush1.msra.mxu0 0.0
        %465 = vmatprep.subr.mxu0 0.0
        %466 = vmatpush1.msra.mxu0 0.0
        %467 = vmatprep.subr.mxu0 0.0
        %468 = vmatpush1.msra.mxu0 0.0
        %469 = vmatprep.subr.mxu0 0.0
        %470 = vmatpush1.msra.mxu0 0.0
        %471 = vmatprep.subr.mxu0 0.0
        %472 = vmatpush1.msra.mxu0 0.0
        %473 = vmatprep.subr.mxu0 0.0
        %474 = vmatpush1.msra.mxu0 0.0
        %475 = vmatprep.subr.mxu0 0.0
        %476 = vmatpush1.msra.mxu0 0.0
        %477 = vmatprep.subr.mxu0 0.0
        %478 = vmatpush1.msra.mxu0 0.0
        %479 = vmatprep.subr.mxu0 0.0
        %480 = vmatpush1.msra.mxu0 0.0
        %481 = vmatprep.subr.mxu0 0.0
        %482 = vmatpush1.msra.mxu0 0.0
        %483 = vmatprep.subr.mxu0 0.0
        %484 = vmatpush1.msra.mxu0 0.0
        %485 = vmatprep.subr.mxu0 0.0
        %486 = vmatpush1.msra.mxu0 0.0
        %487 = vmatprep.subr.mxu0 0.0
        %488 = vmatpush1.msra.mxu0 0.0
        %489 = vmatprep.subr.mxu0 0.0
        %490 = vmatpush1.msra.mxu0 0.0
        %491 = vmatprep.subr.mxu0 0.0
        %492 = vmatpush1.msra.mxu0 0.0
        %493 = vmatprep.subr.mxu0 0.0
        %494 = vmatpush1.msra.mxu0 0.0
        %495 = vmatprep.subr.mxu0 0.0
        %496 = vmatpush1.msra.mxu0 0.0
        %497 = vmatprep.subr.mxu0 0.0
        %498 = vmatpush1.msra.mxu0 0.0
        %499 = vmatprep.subr.mxu0 0.0
        %500 = vmatpush1.msra.mxu0 0.0
        %501 = vmatprep.subr.mxu0 0.0
        %502 = vmatpush1.msra.mxu0 0.0
        %503 = vmatprep.subr.mxu0 0.0
        %504 = vmatpush1.msra.mxu0 0.0
        %505 = vmatprep.subr.mxu0 0.0
        %506 = vmatpush1.msra.mxu0 0.0
        %507 = vmatprep.subr.mxu0 0.0
        %508 = vmatpush1.msra.mxu0 0.0
        %509 = vmatprep.mubr.f32.mxu0 0.0
        %v510 = vand.u32 %v266, 4294901760
        %v511 = vsub.f32 %v266, %v510
        %512 = vmatmul.mubr.f32.gmra.mrb[0].mxu0 %v511
        %v513 = vpop.f32.mrb[0].mxu0
        %v514 = vadd.f32 %v434, %v513
        %v515 = vpop.f32.mrb[0].mxu0
        %516 = vmatprep.mubr.f32.mxu0 0.0
        %v517 = vand.u32 %v269, 4294901760
        %v518 = vsub.f32 %v269, %v517
        %519 = vmatmul.mubr.f32.gmra.mrb[0].mxu0 %v518
        %v520 = vpop.f32.mrb[0].mxu0
        %v521 = vadd.f32 %v440, %v520
        %v522 = vpop.f32.mrb[0].mxu0
        %523 = vdwg.mxu0
        %524 = vmatprep.subr.mxu0 0.0
        %v525 = vand.u32 %v273, 4294901760
        %526 = vmatpush1.msra.mxu0 %v525
        %527 = vmatprep.subr.mxu0 0.0
        %528 = vmatpush1.msra.mxu0 0.0
        %529 = vmatprep.subr.mxu0 0.0
        %530 = vmatpush1.msra.mxu0 0.0
        %531 = vmatprep.subr.mxu0 0.0
        %532 = vmatpush1.msra.mxu0 0.0
        %533 = vmatprep.subr.mxu0 0.0
        %534 = vmatpush1.msra.mxu0 0.0
        %535 = vmatprep.subr.mxu0 0.0
        %536 = vmatpush1.msra.mxu0 0.0
        %537 = vmatprep.subr.mxu0 0.0
        %538 = vmatpush1.msra.mxu0 0.0
        %539 = vmatprep.subr.mxu0 0.0
        %540 = vmatpush1.msra.mxu0 0.0
        %541 = vmatprep.subr.mxu0 0.0
        %542 = vmatpush1.msra.mxu0 0.0
        %543 = vmatprep.subr.mxu0 0.0
        %544 = vmatpush1.msra.mxu0 0.0
        %545 = vmatprep.subr.mxu0 0.0
        %546 = vmatpush1.msra.mxu0 0.0
        %547 = vmatprep.subr.mxu0 0.0
        %548 = vmatpush1.msra.mxu0 0.0
        %549 = vmatprep.subr.mxu0 0.0
        %550 = vmatpush1.msra.mxu0 0.0
        %551 = vmatprep.subr.mxu0 0.0
        %552 = vmatpush1.msra.mxu0 0.0
        %553 = vmatprep.subr.mxu0 0.0
        %554 = vmatpush1.msra.mxu0 0.0
        %555 = vmatprep.subr.mxu0 0.0
        %556 = vmatpush1.msra.mxu0 0.0
        %557 = vmatprep.subr.mxu0 0.0
        %558 = vmatpush1.msra.mxu0 0.0
        %559 = vmatprep.subr.mxu0 0.0
        %560 = vmatpush1.msra.mxu0 0.0
        %561 = vmatprep.subr.mxu0 0.0
        %562 = vmatpush1.msra.mxu0 0.0
        %563 = vmatprep.subr.mxu0 0.0
        %564 = vmatpush1.msra.mxu0 0.0
        %565 = vmatprep.subr.mxu0 0.0
        %566 = vmatpush1.msra.mxu0 0.0
        %567 = vmatprep.subr.mxu0 0.0
        %568 = vmatpush1.msra.mxu0 0.0
        %569 = vmatprep.subr.mxu0 0.0
        %570 = vmatpush1.msra.mxu0 0.0
        %571 = vmatprep.subr.mxu0 0.0
        %572 = vmatpush1.msra.mxu0 0.0
        %573 = vmatprep.subr.mxu0 0.0
        %574 = vmatpush1.msra.mxu0 0.0
        %575 = vmatprep.subr.mxu0 0.0
        %576 = vmatpush1.msra.mxu0 0.0
        %577 = vmatprep.subr.mxu0 0.0
        %578 = vmatpush1.msra.mxu0 0.0
        %579 = vmatprep.subr.mxu0 0.0
        %580 = vmatpush1.msra.mxu0 0.0
        %581 = vmatprep.subr.mxu0 0.0
        %582 = vmatpush1.msra.mxu0 0.0
        %583 = vmatprep.subr.mxu0 0.0
        %584 = vmatpush1.msra.mxu0 0.0
        %585 = vmatprep.subr.mxu0 0.0
        %586 = vmatpush1.msra.mxu0 0.0
        %587 = vmatprep.subr.mxu0 0.0
        %588 = vmatpush1.msra.mxu0 0.0
        %589 = vmatprep.mubr.f32.mxu0 0.0
        %v590 = vand.u32 %v266, 4294901760
        %v591 = vsub.f32 %v266, %v590
        %v592 = vand.u32 %v591, 4294901760
        %593 = vmatmul.mubr.f32.gmra.mrb[0].mxu0 %v592
        %v594 = vpop.f32.mrb[0].mxu0
        %v595 = vadd.f32 %v514, %v594
        %v596 = vpop.f32.mrb[0].mxu0
        %597 = vmatprep.mubr.f32.mxu0 0.0
        %v598 = vand.u32 %v269, 4294901760
        %v599 = vsub.f32 %v269, %v598
        %v600 = vand.u32 %v599, 4294901760
        %601 = vmatmul.mubr.f32.gmra.mrb[0].mxu0 %v600
        %v602 = vpop.f32.mrb[0].mxu0
        %v603 = vadd.f32 %v521, %v602
        %v604 = vpop.f32.mrb[0].mxu0
        %605 = vdwg.mxu0
        %606 = vmatprep.subr.mxu0 0.0
        %v607 = vand.u32 %v273, 4294901760
        %v608 = vsub.f32 %v273, %v607
        %v609 = vand.u32 %v608, 4294901760
        %610 = vmatpush1.msra.mxu0 %v609
        %611 = vmatprep.subr.mxu0 0.0
        %612 = vmatpush1.msra.mxu0 0.0
        %613 = vmatprep.subr.mxu0 0.0
        %614 = vmatpush1.msra.mxu0 0.0
        %615 = vmatprep.subr.mxu0 0.0
        %616 = vmatpush1.msra.mxu0 0.0
        %617 = vmatprep.subr.mxu0 0.0
        %618 = vmatpush1.msra.mxu0 0.0
        %619 = vmatprep.subr.mxu0 0.0
        %620 = vmatpush1.msra.mxu0 0.0
        %621 = vmatprep.subr.mxu0 0.0
        %622 = vmatpush1.msra.mxu0 0.0
        %623 = vmatprep.subr.mxu0 0.0
        %624 = vmatpush1.msra.mxu0 0.0
        %625 = vmatprep.subr.mxu0 0.0
        %626 = vmatpush1.msra.mxu0 0.0
        %627 = vmatprep.subr.mxu0 0.0
        %628 = vmatpush1.msra.mxu0 0.0
        %629 = vmatprep.subr.mxu0 0.0
        %630 = vmatpush1.msra.mxu0 0.0
        %631 = vmatprep.subr.mxu0 0.0
        %632 = vmatpush1.msra.mxu0 0.0
        %633 = vmatprep.subr.mxu0 0.0
        %634 = vmatpush1.msra.mxu0 0.0
        %635 = vmatprep.subr.mxu0 0.0
        %636 = vmatpush1.msra.mxu0 0.0
        %637 = vmatprep.subr.mxu0 0.0
        %638 = vmatpush1.msra.mxu0 0.0
        %639 = vmatprep.subr.mxu0 0.0
        %640 = vmatpush1.msra.mxu0 0.0
        %641 = vmatprep.subr.mxu0 0.0
        %642 = vmatpush1.msra.mxu0 0.0
        %643 = vmatprep.subr.mxu0 0.0
        %644 = vmatpush1.msra.mxu0 0.0
        %645 = vmatprep.subr.mxu0 0.0
        %646 = vmatpush1.msra.mxu0 0.0
        %647 = vmatprep.subr.mxu0 0.0
        %648 = vmatpush1.msra.mxu0 0.0
        %649 = vmatprep.subr.mxu0 0.0
        %650 = vmatpush1.msra.mxu0 0.0
        %651 = vmatprep.subr.mxu0 0.0
        %652 = vmatpush1.msra.mxu0 0.0
        %653 = vmatprep.subr.mxu0 0.0
        %654 = vmatpush1.msra.mxu0 0.0
        %655 = vmatprep.subr.mxu0 0.0
        %656 = vmatpush1.msra.mxu0 0.0
        %657 = vmatprep.subr.mxu0 0.0
        %658 = vmatpush1.msra.mxu0 0.0
        %659 = vmatprep.subr.mxu0 0.0
        %660 = vmatpush1.msra.mxu0 0.0
        %661 = vmatprep.subr.mxu0 0.0
        %662 = vmatpush1.msra.mxu0 0.0
        %663 = vmatprep.subr.mxu0 0.0
        %664 = vmatpush1.msra.mxu0 0.0
        %665 = vmatprep.subr.mxu0 0.0
        %666 = vmatpush1.msra.mxu0 0.0
        %667 = vmatprep.subr.mxu0 0.0
        %668 = vmatpush1.msra.mxu0 0.0
        %669 = vmatprep.subr.mxu0 0.0
        %670 = vmatpush1.msra.mxu0 0.0
        %671 = vmatprep.subr.mxu0 0.0
        %672 = vmatpush1.msra.mxu0 0.0
        %673 = vmatprep.mubr.f32.mxu0 0.0
        %v674 = vand.u32 %v266, 4294901760
        %675 = vmatmul.mubr.f32.gmra.mrb[0].mxu0 %v674
        %v676 = vpop.f32.mrb[0].mxu0
        %v677 = vadd.f32 %v595, %v676
        %v678 = vpop.f32.mrb[0].mxu0
        %679 = vmatprep.mubr.f32.mxu0 0.0
        %v680 = vand.u32 %v269, 4294901760
        %681 = vmatmul.mubr.f32.gmra.mrb[0].mxu0 %v680
        %v682 = vpop.f32.mrb[0].mxu0
        %v683 = vadd.f32 %v603, %v682
        %v684 = vpop.f32.mrb[0].mxu0
        %685 = vdwg.mxu0
        %686 = vmatprep.subr.mxu0 0.0
        %v687 = vand.u32 %v273, 4294901760
        %688 = vmatpush1.msra.mxu0 %v687
        %689 = vmatprep.subr.mxu0 0.0
        %690 = vmatpush1.msra.mxu0 0.0
        %691 = vmatprep.subr.mxu0 0.0
        %692 = vmatpush1.msra.mxu0 0.0
        %693 = vmatprep.subr.mxu0 0.0
        %694 = vmatpush1.msra.mxu0 0.0
        %695 = vmatprep.subr.mxu0 0.0
        %696 = vmatpush1.msra.mxu0 0.0
        %697 = vmatprep.subr.mxu0 0.0
        %698 = vmatpush1.msra.mxu0 0.0
        %699 = vmatprep.subr.mxu0 0.0
        %700 = vmatpush1.msra.mxu0 0.0
        %701 = vmatprep.subr.mxu0 0.0
        %702 = vmatpush1.msra.mxu0 0.0
        %703 = vmatprep.subr.mxu0 0.0
        %704 = vmatpush1.msra.mxu0 0.0
        %705 = vmatprep.subr.mxu0 0.0
        %706 = vmatpush1.msra.mxu0 0.0
        %707 = vmatprep.subr.mxu0 0.0
        %708 = vmatpush1.msra.mxu0 0.0
        %709 = vmatprep.subr.mxu0 0.0
        %710 = vmatpush1.msra.mxu0 0.0
        %711 = vmatprep.subr.mxu0 0.0
        %712 = vmatpush1.msra.mxu0 0.0
        %713 = vmatprep.subr.mxu0 0.0
        %714 = vmatpush1.msra.mxu0 0.0
        %715 = vmatprep.subr.mxu0 0.0
        %716 = vmatpush1.msra.mxu0 0.0
        %717 = vmatprep.subr.mxu0 0.0
        %718 = vmatpush1.msra.mxu0 0.0
        %719 = vmatprep.subr.mxu0 0.0
        %720 = vmatpush1.msra.mxu0 0.0
        %721 = vmatprep.subr.mxu0 0.0
        %722 = vmatpush1.msra.mxu0 0.0
        %723 = vmatprep.subr.mxu0 0.0
        %724 = vmatpush1.msra.mxu0 0.0
        %725 = vmatprep.subr.mxu0 0.0
        %726 = vmatpush1.msra.mxu0 0.0
        %727 = vmatprep.subr.mxu0 0.0
        %728 = vmatpush1.msra.mxu0 0.0
        %729 = vmatprep.subr.mxu0 0.0
        %730 = vmatpush1.msra.mxu0 0.0
        %731 = vmatprep.subr.mxu0 0.0
        %732 = vmatpush1.msra.mxu0 0.0
        %733 = vmatprep.subr.mxu0 0.0
        %734 = vmatpush1.msra.mxu0 0.0
        %735 = vmatprep.subr.mxu0 0.0
        %736 = vmatpush1.msra.mxu0 0.0
        %737 = vmatprep.subr.mxu0 0.0
        %738 = vmatpush1.msra.mxu0 0.0
        %739 = vmatprep.subr.mxu0 0.0
        %740 = vmatpush1.msra.mxu0 0.0
        %741 = vmatprep.subr.mxu0 0.0
        %742 = vmatpush1.msra.mxu0 0.0
        %743 = vmatprep.subr.mxu0 0.0
        %744 = vmatpush1.msra.mxu0 0.0
        %745 = vmatprep.subr.mxu0 0.0
        %746 = vmatpush1.msra.mxu0 0.0
        %747 = vmatprep.subr.mxu0 0.0
        %748 = vmatpush1.msra.mxu0 0.0
        %749 = vmatprep.subr.mxu0 0.0
        %750 = vmatpush1.msra.mxu0 0.0
        %751 = vmatprep.mubr.f32.mxu0 0.0
        %v752 = vand.u32 %v266, 4294901760
        %753 = vmatmul.mubr.f32.gmra.mrb[0].mxu0 %v752
        %v754 = vpop.f32.mrb[0].mxu0
        %v755 = vadd.f32 %v677, %v754
        %v756 = vpop.f32.mrb[0].mxu0
        %757 = vmatprep.mubr.f32.mxu0 0.0
        %v758 = vand.u32 %v269, 4294901760
        %759 = vmatmul.mubr.f32.gmra.mrb[0].mxu0 %v758
        %v760 = vpop.f32.mrb[0].mxu0
        %v761 = vadd.f32 %v683, %v760
        %v762 = vpop.f32.mrb[0].mxu0
        %763 = vdwg.mxu0
        %v764 = vsub.f32 %v755, %v249
        %v765 = vsub.f32 %v761, %v250
        %v766 = vmul.f32 %v764, %v764
        %v767 = vmul.f32 %v765, %v765
        %v768 = vmul.f32 %v755, %v249
        %v769 = vmul.f32 %v761, %v250
        %v770 = vmul.f32 %v249, %v249
        %v771 = vmul.f32 %v250, %v250
        %vm772 = vcmask 392192
        %v774 = vsel %vm772, %v766, 0
        %v777 = vsel %vm772, %v767, 0
        %779 = vmatprep.subr.mxu0 0.0
        %v780 = vand.u32 %v252, 4294901760
        %781 = vmatpush1.msra.mxu0 %v780
        %782 = vmatprep.subr.mxu0 0.0
        %v783 = vand.u32 %v253, 4294901760
        %784 = vmatpush1.msra.mxu0 %v783
        %785 = vmatprep.subr.mxu0 0.0
        %v786 = vand.u32 %v254, 4294901760
        %787 = vmatpush1.msra.mxu0 %v786
        %788 = vmatprep.subr.mxu0 0.0
        %v789 = vand.u32 %v255, 4294901760
        %790 = vmatpush1.msra.mxu0 %v789
        %791 = vmatprep.subr.mxu0 0.0
        %v792 = vand.u32 %v256, 4294901760
        %793 = vmatpush1.msra.mxu0 %v792
        %794 = vmatprep.subr.mxu0 0.0
        %v795 = vand.u32 %v257, 4294901760
        %796 = vmatpush1.msra.mxu0 %v795
        %797 = vmatprep.subr.mxu0 0.0
        %798 = vmatpush1.msra.mxu0 0.0
        %799 = vmatprep.subr.mxu0 0.0
        %800 = vmatpush1.msra.mxu0 0.0
        %801 = vmatprep.subr.mxu0 0.0
        %802 = vmatpush1.msra.mxu0 0.0
        %803 = vmatprep.subr.mxu0 0.0
        %804 = vmatpush1.msra.mxu0 0.0
        %805 = vmatprep.subr.mxu0 0.0
        %806 = vmatpush1.msra.mxu0 0.0
        %807 = vmatprep.subr.mxu0 0.0
        %808 = vmatpush1.msra.mxu0 0.0
        %809 = vmatprep.subr.mxu0 0.0
        %810 = vmatpush1.msra.mxu0 0.0
        %811 = vmatprep.subr.mxu0 0.0
        %812 = vmatpush1.msra.mxu0 0.0
        %813 = vmatprep.subr.mxu0 0.0
        %814 = vmatpush1.msra.mxu0 0.0
        %815 = vmatprep.subr.mxu0 0.0
        %816 = vmatpush1.msra.mxu0 0.0
        %817 = vmatprep.subr.mxu0 0.0
        %818 = vmatpush1.msra.mxu0 0.0
        %819 = vmatprep.subr.mxu0 0.0
        %820 = vmatpush1.msra.mxu0 0.0
        %821 = vmatprep.subr.mxu0 0.0
        %822 = vmatpush1.msra.mxu0 0.0
        %823 = vmatprep.subr.mxu0 0.0
        %824 = vmatpush1.msra.mxu0 0.0
        %825 = vmatprep.subr.mxu0 0.0
        %826 = vmatpush1.msra.mxu0 0.0
        %827 = vmatprep.subr.mxu0 0.0
        %828 = vmatpush1.msra.mxu0 0.0
        %829 = vmatprep.subr.mxu0 0.0
        %830 = vmatpush1.msra.mxu0 0.0
        %831 = vmatprep.subr.mxu0 0.0
        %832 = vmatpush1.msra.mxu0 0.0
        %833 = vmatprep.subr.mxu0 0.0
        %834 = vmatpush1.msra.mxu0 0.0
        %835 = vmatprep.subr.mxu0 0.0
        %836 = vmatpush1.msra.mxu0 0.0
        %837 = vmatprep.subr.mxu0 0.0
        %838 = vmatpush1.msra.mxu0 0.0
        %839 = vmatprep.subr.mxu0 0.0
        %840 = vmatpush1.msra.mxu0 0.0
        %841 = vmatprep.subr.mxu0 0.0
        %842 = vmatpush1.msra.mxu0 0.0
        %843 = vmatprep.subr.mxu0 0.0
        %844 = vmatpush1.msra.mxu0 0.0
        %845 = vmatprep.subr.mxu0 0.0
        %846 = vmatpush1.msra.mxu0 0.0
        %847 = vmatprep.subr.mxu0 0.0
        %848 = vmatpush1.msra.mxu0 0.0
        %849 = vmatprep.mubr.f32.mxu0 0.0
        %v850 = vand.u32 %v774, 4294901760
        %v851 = vsub.f32 %v774, %v850
        %v852 = vand.u32 %v851, 4294901760
        %v853 = vsub.f32 %v851, %v852
        %v854 = vand.u32 %v853, 4294901760
        %855 = vmatmul.mubr.f32.gmra.mrb[0].mxu0 %v854
        %v856 = vpop.f32.mrb[0].mxu0
        %v857 = vadd.f32 0.0, %v856
        %v858 = vpop.f32.mrb[0].mxu0
        %859 = vmatprep.mubr.f32.mxu0 0.0
        %v860 = vand.u32 %v777, 4294901760
        %v861 = vsub.f32 %v777, %v860
        %v862 = vand.u32 %v861, 4294901760
        %v863 = vsub.f32 %v861, %v862
        %v864 = vand.u32 %v863, 4294901760
        %865 = vmatmul.mubr.f32.gmra.mrb[0].mxu0 %v864
        %v866 = vpop.f32.mrb[0].mxu0
        %v867 = vadd.f32 0.0, %v866
        %v868 = vpop.f32.mrb[0].mxu0
        %869 = vdwg.mxu0
        %870 = vmatprep.subr.mxu0 0.0
        %v871 = vand.u32 %v252, 4294901760
        %v872 = vsub.f32 %v252, %v871
        %v873 = vand.u32 %v872, 4294901760
        %v874 = vsub.f32 %v872, %v873
        %v875 = vand.u32 %v874, 4294901760
        %876 = vmatpush1.msra.mxu0 %v875
        %877 = vmatprep.subr.mxu0 0.0
        %v878 = vand.u32 %v253, 4294901760
        %v879 = vsub.f32 %v253, %v878
        %v880 = vand.u32 %v879, 4294901760
        %v881 = vsub.f32 %v879, %v880
        %v882 = vand.u32 %v881, 4294901760
        %883 = vmatpush1.msra.mxu0 %v882
        %884 = vmatprep.subr.mxu0 0.0
        %v885 = vand.u32 %v254, 4294901760
        %v886 = vsub.f32 %v254, %v885
        %v887 = vand.u32 %v886, 4294901760
        %v888 = vsub.f32 %v886, %v887
        %v889 = vand.u32 %v888, 4294901760
        %890 = vmatpush1.msra.mxu0 %v889
        %891 = vmatprep.subr.mxu0 0.0
        %v892 = vand.u32 %v255, 4294901760
        %v893 = vsub.f32 %v255, %v892
        %v894 = vand.u32 %v893, 4294901760
        %v895 = vsub.f32 %v893, %v894
        %v896 = vand.u32 %v895, 4294901760
        %897 = vmatpush1.msra.mxu0 %v896
        %898 = vmatprep.subr.mxu0 0.0
        %v899 = vand.u32 %v256, 4294901760
        %v900 = vsub.f32 %v256, %v899
        %v901 = vand.u32 %v900, 4294901760
        %v902 = vsub.f32 %v900, %v901
        %v903 = vand.u32 %v902, 4294901760
        %904 = vmatpush1.msra.mxu0 %v903
        %905 = vmatprep.subr.mxu0 0.0
        %v906 = vand.u32 %v257, 4294901760
        %v907 = vsub.f32 %v257, %v906
        %v908 = vand.u32 %v907, 4294901760
        %v909 = vsub.f32 %v907, %v908
        %v910 = vand.u32 %v909, 4294901760
        %911 = vmatpush1.msra.mxu0 %v910
        %912 = vmatprep.subr.mxu0 0.0
        %913 = vmatpush1.msra.mxu0 0.0
        %914 = vmatprep.subr.mxu0 0.0
        %915 = vmatpush1.msra.mxu0 0.0
        %916 = vmatprep.subr.mxu0 0.0
        %917 = vmatpush1.msra.mxu0 0.0
        %918 = vmatprep.subr.mxu0 0.0
        %919 = vmatpush1.msra.mxu0 0.0
        %920 = vmatprep.subr.mxu0 0.0
        %921 = vmatpush1.msra.mxu0 0.0
        %922 = vmatprep.subr.mxu0 0.0
        %923 = vmatpush1.msra.mxu0 0.0
        %924 = vmatprep.subr.mxu0 0.0
        %925 = vmatpush1.msra.mxu0 0.0
        %926 = vmatprep.subr.mxu0 0.0
        %927 = vmatpush1.msra.mxu0 0.0
        %928 = vmatprep.subr.mxu0 0.0
        %929 = vmatpush1.msra.mxu0 0.0
        %930 = vmatprep.subr.mxu0 0.0
        %931 = vmatpush1.msra.mxu0 0.0
        %932 = vmatprep.subr.mxu0 0.0
        %933 = vmatpush1.msra.mxu0 0.0
        %934 = vmatprep.subr.mxu0 0.0
        %935 = vmatpush1.msra.mxu0 0.0
        %936 = vmatprep.subr.mxu0 0.0
        %937 = vmatpush1.msra.mxu0 0.0
        %938 = vmatprep.subr.mxu0 0.0
        %939 = vmatpush1.msra.mxu0 0.0
        %940 = vmatprep.subr.mxu0 0.0
        %941 = vmatpush1.msra.mxu0 0.0
        %942 = vmatprep.subr.mxu0 0.0
        %943 = vmatpush1.msra.mxu0 0.0
        %944 = vmatprep.subr.mxu0 0.0
        %945 = vmatpush1.msra.mxu0 0.0
        %946 = vmatprep.subr.mxu0 0.0
        %947 = vmatpush1.msra.mxu0 0.0
        %948 = vmatprep.subr.mxu0 0.0
        %949 = vmatpush1.msra.mxu0 0.0
        %950 = vmatprep.subr.mxu0 0.0
        %951 = vmatpush1.msra.mxu0 0.0
        %952 = vmatprep.subr.mxu0 0.0
        %953 = vmatpush1.msra.mxu0 0.0
        %954 = vmatprep.subr.mxu0 0.0
        %955 = vmatpush1.msra.mxu0 0.0
        %956 = vmatprep.subr.mxu0 0.0
        %957 = vmatpush1.msra.mxu0 0.0
        %958 = vmatprep.subr.mxu0 0.0
        %959 = vmatpush1.msra.mxu0 0.0
        %960 = vmatprep.subr.mxu0 0.0
        %961 = vmatpush1.msra.mxu0 0.0
        %962 = vmatprep.subr.mxu0 0.0
        %963 = vmatpush1.msra.mxu0 0.0
        %964 = vmatprep.mubr.f32.mxu0 0.0
        %v965 = vand.u32 %v774, 4294901760
        %966 = vmatmul.mubr.f32.gmra.mrb[0].mxu0 %v965
        %v967 = vpop.f32.mrb[0].mxu0
        %v968 = vadd.f32 %v857, %v967
        %v969 = vpop.f32.mrb[0].mxu0
        %970 = vmatprep.mubr.f32.mxu0 0.0
        %v971 = vand.u32 %v777, 4294901760
        %972 = vmatmul.mubr.f32.gmra.mrb[0].mxu0 %v971
        %v973 = vpop.f32.mrb[0].mxu0
        %v974 = vadd.f32 %v867, %v973
        %v975 = vpop.f32.mrb[0].mxu0
        %976 = vdwg.mxu0
        %977 = vmatprep.subr.mxu0 0.0
        %v978 = vand.u32 %v252, 4294901760
        %v979 = vsub.f32 %v252, %v978
        %980 = vmatpush1.msra.mxu0 %v979
        %981 = vmatprep.subr.mxu0 0.0
        %v982 = vand.u32 %v253, 4294901760
        %v983 = vsub.f32 %v253, %v982
        %984 = vmatpush1.msra.mxu0 %v983
        %985 = vmatprep.subr.mxu0 0.0
        %v986 = vand.u32 %v254, 4294901760
        %v987 = vsub.f32 %v254, %v986
        %988 = vmatpush1.msra.mxu0 %v987
        %989 = vmatprep.subr.mxu0 0.0
        %v990 = vand.u32 %v255, 4294901760
        %v991 = vsub.f32 %v255, %v990
        %992 = vmatpush1.msra.mxu0 %v991
        %993 = vmatprep.subr.mxu0 0.0
        %v994 = vand.u32 %v256, 4294901760
        %v995 = vsub.f32 %v256, %v994
        %996 = vmatpush1.msra.mxu0 %v995
        %997 = vmatprep.subr.mxu0 0.0
        %v998 = vand.u32 %v257, 4294901760
        %v999 = vsub.f32 %v257, %v998
        %1000 = vmatpush1.msra.mxu0 %v999
        %1001 = vmatprep.subr.mxu0 0.0
        %1002 = vmatpush1.msra.mxu0 0.0
        %1003 = vmatprep.subr.mxu0 0.0
        %1004 = vmatpush1.msra.mxu0 0.0
        %1005 = vmatprep.subr.mxu0 0.0
        %1006 = vmatpush1.msra.mxu0 0.0
        %1007 = vmatprep.subr.mxu0 0.0
        %1008 = vmatpush1.msra.mxu0 0.0
        %1009 = vmatprep.subr.mxu0 0.0
        %1010 = vmatpush1.msra.mxu0 0.0
        %1011 = vmatprep.subr.mxu0 0.0
        %1012 = vmatpush1.msra.mxu0 0.0
        %1013 = vmatprep.subr.mxu0 0.0
        %1014 = vmatpush1.msra.mxu0 0.0
        %1015 = vmatprep.subr.mxu0 0.0
        %1016 = vmatpush1.msra.mxu0 0.0
        %1017 = vmatprep.subr.mxu0 0.0
        %1018 = vmatpush1.msra.mxu0 0.0
        %1019 = vmatprep.subr.mxu0 0.0
        %1020 = vmatpush1.msra.mxu0 0.0
        %1021 = vmatprep.subr.mxu0 0.0
        %1022 = vmatpush1.msra.mxu0 0.0
        %1023 = vmatprep.subr.mxu0 0.0
        %1024 = vmatpush1.msra.mxu0 0.0
        %1025 = vmatprep.subr.mxu0 0.0
        %1026 = vmatpush1.msra.mxu0 0.0
        %1027 = vmatprep.subr.mxu0 0.0
        %1028 = vmatpush1.msra.mxu0 0.0
        %1029 = vmatprep.subr.mxu0 0.0
        %1030 = vmatpush1.msra.mxu0 0.0
        %1031 = vmatprep.subr.mxu0 0.0
        %1032 = vmatpush1.msra.mxu0 0.0
        %1033 = vmatprep.subr.mxu0 0.0
        %1034 = vmatpush1.msra.mxu0 0.0
        %1035 = vmatprep.subr.mxu0 0.0
        %1036 = vmatpush1.msra.mxu0 0.0
        %1037 = vmatprep.subr.mxu0 0.0
        %1038 = vmatpush1.msra.mxu0 0.0
        %1039 = vmatprep.subr.mxu0 0.0
        %1040 = vmatpush1.msra.mxu0 0.0
        %1041 = vmatprep.subr.mxu0 0.0
        %1042 = vmatpush1.msra.mxu0 0.0
        %1043 = vmatprep.subr.mxu0 0.0
        %1044 = vmatpush1.msra.mxu0 0.0
        %1045 = vmatprep.subr.mxu0 0.0
        %1046 = vmatpush1.msra.mxu0 0.0
        %1047 = vmatprep.subr.mxu0 0.0
        %1048 = vmatpush1.msra.mxu0 0.0
        %1049 = vmatprep.subr.mxu0 0.0
        %1050 = vmatpush1.msra.mxu0 0.0
        %1051 = vmatprep.subr.mxu0 0.0
        %1052 = vmatpush1.msra.mxu0 0.0
        %1053 = vmatprep.mubr.f32.mxu0 0.0
        %v1054 = vand.u32 %v774, 4294901760
        %v1055 = vsub.f32 %v774, %v1054
        %1056 = vmatmul.mubr.f32.gmra.mrb[0].mxu0 %v1055
        %v1057 = vpop.f32.mrb[0].mxu0
        %v1058 = vadd.f32 %v968, %v1057
        %v1059 = vpop.f32.mrb[0].mxu0
        %1060 = vmatprep.mubr.f32.mxu0 0.0
        %v1061 = vand.u32 %v777, 4294901760
        %v1062 = vsub.f32 %v777, %v1061
        %1063 = vmatmul.mubr.f32.gmra.mrb[0].mxu0 %v1062
        %v1064 = vpop.f32.mrb[0].mxu0
        %v1065 = vadd.f32 %v974, %v1064
        %v1066 = vpop.f32.mrb[0].mxu0
        %1067 = vdwg.mxu0
        %1068 = vmatprep.subr.mxu0 0.0
        %v1069 = vand.u32 %v252, 4294901760
        %1070 = vmatpush1.msra.mxu0 %v1069
        %1071 = vmatprep.subr.mxu0 0.0
        %v1072 = vand.u32 %v253, 4294901760
        %1073 = vmatpush1.msra.mxu0 %v1072
        %1074 = vmatprep.subr.mxu0 0.0
        %v1075 = vand.u32 %v254, 4294901760
        %1076 = vmatpush1.msra.mxu0 %v1075
        %1077 = vmatprep.subr.mxu0 0.0
        %v1078 = vand.u32 %v255, 4294901760
        %1079 = vmatpush1.msra.mxu0 %v1078
        %1080 = vmatprep.subr.mxu0 0.0
        %v1081 = vand.u32 %v256, 4294901760
        %1082 = vmatpush1.msra.mxu0 %v1081
        %1083 = vmatprep.subr.mxu0 0.0
        %v1084 = vand.u32 %v257, 4294901760
        %1085 = vmatpush1.msra.mxu0 %v1084
        %1086 = vmatprep.subr.mxu0 0.0
        %1087 = vmatpush1.msra.mxu0 0.0
        %1088 = vmatprep.subr.mxu0 0.0
        %1089 = vmatpush1.msra.mxu0 0.0
        %1090 = vmatprep.subr.mxu0 0.0
        %1091 = vmatpush1.msra.mxu0 0.0
        %1092 = vmatprep.subr.mxu0 0.0
        %1093 = vmatpush1.msra.mxu0 0.0
        %1094 = vmatprep.subr.mxu0 0.0
        %1095 = vmatpush1.msra.mxu0 0.0
        %1096 = vmatprep.subr.mxu0 0.0
        %1097 = vmatpush1.msra.mxu0 0.0
        %1098 = vmatprep.subr.mxu0 0.0
        %1099 = vmatpush1.msra.mxu0 0.0
        %1100 = vmatprep.subr.mxu0 0.0
        %1101 = vmatpush1.msra.mxu0 0.0
        %1102 = vmatprep.subr.mxu0 0.0
        %1103 = vmatpush1.msra.mxu0 0.0
        %1104 = vmatprep.subr.mxu0 0.0
        %1105 = vmatpush1.msra.mxu0 0.0
        %1106 = vmatprep.subr.mxu0 0.0
        %1107 = vmatpush1.msra.mxu0 0.0
        %1108 = vmatprep.subr.mxu0 0.0
        %1109 = vmatpush1.msra.mxu0 0.0
        %1110 = vmatprep.subr.mxu0 0.0
        %1111 = vmatpush1.msra.mxu0 0.0
        %1112 = vmatprep.subr.mxu0 0.0
        %1113 = vmatpush1.msra.mxu0 0.0
        %1114 = vmatprep.subr.mxu0 0.0
        %1115 = vmatpush1.msra.mxu0 0.0
        %1116 = vmatprep.subr.mxu0 0.0
        %1117 = vmatpush1.msra.mxu0 0.0
        %1118 = vmatprep.subr.mxu0 0.0
        %1119 = vmatpush1.msra.mxu0 0.0
        %1120 = vmatprep.subr.mxu0 0.0
        %1121 = vmatpush1.msra.mxu0 0.0
        %1122 = vmatprep.subr.mxu0 0.0
        %1123 = vmatpush1.msra.mxu0 0.0
        %1124 = vmatprep.subr.mxu0 0.0
        %1125 = vmatpush1.msra.mxu0 0.0
        %1126 = vmatprep.subr.mxu0 0.0
        %1127 = vmatpush1.msra.mxu0 0.0
        %1128 = vmatprep.subr.mxu0 0.0
        %1129 = vmatpush1.msra.mxu0 0.0
        %1130 = vmatprep.subr.mxu0 0.0
        %1131 = vmatpush1.msra.mxu0 0.0
        %1132 = vmatprep.subr.mxu0 0.0
        %1133 = vmatpush1.msra.mxu0 0.0
        %1134 = vmatprep.subr.mxu0 0.0
        %1135 = vmatpush1.msra.mxu0 0.0
        %1136 = vmatprep.subr.mxu0 0.0
        %1137 = vmatpush1.msra.mxu0 0.0
        %1138 = vmatprep.mubr.f32.mxu0 0.0
        %v1139 = vand.u32 %v774, 4294901760
        %v1140 = vsub.f32 %v774, %v1139
        %v1141 = vand.u32 %v1140, 4294901760
        %1142 = vmatmul.mubr.f32.gmra.mrb[0].mxu0 %v1141
        %v1143 = vpop.f32.mrb[0].mxu0
        %v1144 = vadd.f32 %v1058, %v1143
        %v1145 = vpop.f32.mrb[0].mxu0
        %1146 = vmatprep.mubr.f32.mxu0 0.0
        %v1147 = vand.u32 %v777, 4294901760
        %v1148 = vsub.f32 %v777, %v1147
        %v1149 = vand.u32 %v1148, 4294901760
        %1150 = vmatmul.mubr.f32.gmra.mrb[0].mxu0 %v1149
        %v1151 = vpop.f32.mrb[0].mxu0
        %v1152 = vadd.f32 %v1065, %v1151
        %v1153 = vpop.f32.mrb[0].mxu0
        %1154 = vdwg.mxu0
        %1155 = vmatprep.subr.mxu0 0.0
        %v1156 = vand.u32 %v252, 4294901760
        %v1157 = vsub.f32 %v252, %v1156
        %v1158 = vand.u32 %v1157, 4294901760
        %1159 = vmatpush1.msra.mxu0 %v1158
        %1160 = vmatprep.subr.mxu0 0.0
        %v1161 = vand.u32 %v253, 4294901760
        %v1162 = vsub.f32 %v253, %v1161
        %v1163 = vand.u32 %v1162, 4294901760
        %1164 = vmatpush1.msra.mxu0 %v1163
        %1165 = vmatprep.subr.mxu0 0.0
        %v1166 = vand.u32 %v254, 4294901760
        %v1167 = vsub.f32 %v254, %v1166
        %v1168 = vand.u32 %v1167, 4294901760
        %1169 = vmatpush1.msra.mxu0 %v1168
        %1170 = vmatprep.subr.mxu0 0.0
        %v1171 = vand.u32 %v255, 4294901760
        %v1172 = vsub.f32 %v255, %v1171
        %v1173 = vand.u32 %v1172, 4294901760
        %1174 = vmatpush1.msra.mxu0 %v1173
        %1175 = vmatprep.subr.mxu0 0.0
        %v1176 = vand.u32 %v256, 4294901760
        %v1177 = vsub.f32 %v256, %v1176
        %v1178 = vand.u32 %v1177, 4294901760
        %1179 = vmatpush1.msra.mxu0 %v1178
        %1180 = vmatprep.subr.mxu0 0.0
        %v1181 = vand.u32 %v257, 4294901760
        %v1182 = vsub.f32 %v257, %v1181
        %v1183 = vand.u32 %v1182, 4294901760
        %1184 = vmatpush1.msra.mxu0 %v1183
        %1185 = vmatprep.subr.mxu0 0.0
        %1186 = vmatpush1.msra.mxu0 0.0
        %1187 = vmatprep.subr.mxu0 0.0
        %1188 = vmatpush1.msra.mxu0 0.0
        %1189 = vmatprep.subr.mxu0 0.0
        %1190 = vmatpush1.msra.mxu0 0.0
        %1191 = vmatprep.subr.mxu0 0.0
        %1192 = vmatpush1.msra.mxu0 0.0
        %1193 = vmatprep.subr.mxu0 0.0
        %1194 = vmatpush1.msra.mxu0 0.0
        %1195 = vmatprep.subr.mxu0 0.0
        %1196 = vmatpush1.msra.mxu0 0.0
        %1197 = vmatprep.subr.mxu0 0.0
        %1198 = vmatpush1.msra.mxu0 0.0
        %1199 = vmatprep.subr.mxu0 0.0
        %1200 = vmatpush1.msra.mxu0 0.0
        %1201 = vmatprep.subr.mxu0 0.0
        %1202 = vmatpush1.msra.mxu0 0.0
        %1203 = vmatprep.subr.mxu0 0.0
        %1204 = vmatpush1.msra.mxu0 0.0
        %1205 = vmatprep.subr.mxu0 0.0
        %1206 = vmatpush1.msra.mxu0 0.0
        %1207 = vmatprep.subr.mxu0 0.0
        %1208 = vmatpush1.msra.mxu0 0.0
        %1209 = vmatprep.subr.mxu0 0.0
        %1210 = vmatpush1.msra.mxu0 0.0
        %1211 = vmatprep.subr.mxu0 0.0
        %1212 = vmatpush1.msra.mxu0 0.0
        %1213 = vmatprep.subr.mxu0 0.0
        %1214 = vmatpush1.msra.mxu0 0.0
        %1215 = vmatprep.subr.mxu0 0.0
        %1216 = vmatpush1.msra.mxu0 0.0
        %1217 = vmatprep.subr.mxu0 0.0
        %1218 = vmatpush1.msra.mxu0 0.0
        %1219 = vmatprep.subr.mxu0 0.0
        %1220 = vmatpush1.msra.mxu0 0.0
        %1221 = vmatprep.subr.mxu0 0.0
        %1222 = vmatpush1.msra.mxu0 0.0
        %1223 = vmatprep.subr.mxu0 0.0
        %1224 = vmatpush1.msra.mxu0 0.0
        %1225 = vmatprep.subr.mxu0 0.0
        %1226 = vmatpush1.msra.mxu0 0.0
        %1227 = vmatprep.subr.mxu0 0.0
        %1228 = vmatpush1.msra.mxu0 0.0
        %1229 = vmatprep.subr.mxu0 0.0
        %1230 = vmatpush1.msra.mxu0 0.0
        %1231 = vmatprep.subr.mxu0 0.0
        %1232 = vmatpush1.msra.mxu0 0.0
        %1233 = vmatprep.subr.mxu0 0.0
        %1234 = vmatpush1.msra.mxu0 0.0
        %1235 = vmatprep.subr.mxu0 0.0
        %1236 = vmatpush1.msra.mxu0 0.0
        %1237 = vmatprep.mubr.f32.mxu0 0.0
        %v1238 = vand.u32 %v774, 4294901760
        %1239 = vmatmul.mubr.f32.gmra.mrb[0].mxu0 %v1238
        %v1240 = vpop.f32.mrb[0].mxu0
        %v1241 = vadd.f32 %v1144, %v1240
        %v1242 = vpop.f32.mrb[0].mxu0
        %1243 = vmatprep.mubr.f32.mxu0 0.0
        %v1244 = vand.u32 %v777, 4294901760
        %1245 = vmatmul.mubr.f32.gmra.mrb[0].mxu0 %v1244
        %v1246 = vpop.f32.mrb[0].mxu0
        %v1247 = vadd.f32 %v1152, %v1246
        %v1248 = vpop.f32.mrb[0].mxu0
        %1249 = vdwg.mxu0
        %1250 = vmatprep.subr.mxu0 0.0
        %v1251 = vand.u32 %v252, 4294901760
        %1252 = vmatpush1.msra.mxu0 %v1251
        %1253 = vmatprep.subr.mxu0 0.0
        %v1254 = vand.u32 %v253, 4294901760
        %1255 = vmatpush1.msra.mxu0 %v1254
        %1256 = vmatprep.subr.mxu0 0.0
        %v1257 = vand.u32 %v254, 4294901760
        %1258 = vmatpush1.msra.mxu0 %v1257
        %1259 = vmatprep.subr.mxu0 0.0
        %v1260 = vand.u32 %v255, 4294901760
        %1261 = vmatpush1.msra.mxu0 %v1260
        %1262 = vmatprep.subr.mxu0 0.0
        %v1263 = vand.u32 %v256, 4294901760
        %1264 = vmatpush1.msra.mxu0 %v1263
        %1265 = vmatprep.subr.mxu0 0.0
        %v1266 = vand.u32 %v257, 4294901760
        %1267 = vmatpush1.msra.mxu0 %v1266
        %1268 = vmatprep.subr.mxu0 0.0
        %1269 = vmatpush1.msra.mxu0 0.0
        %1270 = vmatprep.subr.mxu0 0.0
        %1271 = vmatpush1.msra.mxu0 0.0
        %1272 = vmatprep.subr.mxu0 0.0
        %1273 = vmatpush1.msra.mxu0 0.0
        %1274 = vmatprep.subr.mxu0 0.0
        %1275 = vmatpush1.msra.mxu0 0.0
        %1276 = vmatprep.subr.mxu0 0.0
        %1277 = vmatpush1.msra.mxu0 0.0
        %1278 = vmatprep.subr.mxu0 0.0
        %1279 = vmatpush1.msra.mxu0 0.0
        %1280 = vmatprep.subr.mxu0 0.0
        %1281 = vmatpush1.msra.mxu0 0.0
        %1282 = vmatprep.subr.mxu0 0.0
        %1283 = vmatpush1.msra.mxu0 0.0
        %1284 = vmatprep.subr.mxu0 0.0
        %1285 = vmatpush1.msra.mxu0 0.0
        %1286 = vmatprep.subr.mxu0 0.0
        %1287 = vmatpush1.msra.mxu0 0.0
        %1288 = vmatprep.subr.mxu0 0.0
        %1289 = vmatpush1.msra.mxu0 0.0
        %1290 = vmatprep.subr.mxu0 0.0
        %1291 = vmatpush1.msra.mxu0 0.0
        %1292 = vmatprep.subr.mxu0 0.0
        %1293 = vmatpush1.msra.mxu0 0.0
        %1294 = vmatprep.subr.mxu0 0.0
        %1295 = vmatpush1.msra.mxu0 0.0
        %1296 = vmatprep.subr.mxu0 0.0
        %1297 = vmatpush1.msra.mxu0 0.0
        %1298 = vmatprep.subr.mxu0 0.0
        %1299 = vmatpush1.msra.mxu0 0.0
        %1300 = vmatprep.subr.mxu0 0.0
        %1301 = vmatpush1.msra.mxu0 0.0
        %1302 = vmatprep.subr.mxu0 0.0
        %1303 = vmatpush1.msra.mxu0 0.0
        %1304 = vmatprep.subr.mxu0 0.0
        %1305 = vmatpush1.msra.mxu0 0.0
        %1306 = vmatprep.subr.mxu0 0.0
        %1307 = vmatpush1.msra.mxu0 0.0
        %1308 = vmatprep.subr.mxu0 0.0
        %1309 = vmatpush1.msra.mxu0 0.0
        %1310 = vmatprep.subr.mxu0 0.0
        %1311 = vmatpush1.msra.mxu0 0.0
        %1312 = vmatprep.subr.mxu0 0.0
        %1313 = vmatpush1.msra.mxu0 0.0
        %1314 = vmatprep.subr.mxu0 0.0
        %1315 = vmatpush1.msra.mxu0 0.0
        %1316 = vmatprep.subr.mxu0 0.0
        %1317 = vmatpush1.msra.mxu0 0.0
        %1318 = vmatprep.subr.mxu0 0.0
        %1319 = vmatpush1.msra.mxu0 0.0
        %1320 = vmatprep.mubr.f32.mxu0 0.0
        %v1321 = vand.u32 %v774, 4294901760
        %1322 = vmatmul.mubr.f32.gmra.mrb[0].mxu0 %v1321
        %v1323 = vpop.f32.mrb[0].mxu0
        %v1324 = vadd.f32 %v1241, %v1323
        %v1325 = vpop.f32.mrb[0].mxu0
        %1326 = vmatprep.mubr.f32.mxu0 0.0
        %v1327 = vand.u32 %v777, 4294901760
        %1328 = vmatmul.mubr.f32.gmra.mrb[0].mxu0 %v1327
        %v1329 = vpop.f32.mrb[0].mxu0
        %v1330 = vadd.f32 %v1247, %v1329
        %v1331 = vpop.f32.mrb[0].mxu0
        %1332 = vdwg.mxu0
        %v1334 = vsel %vm772, %v768, 0
        %v1337 = vsel %vm772, %v769, 0
        %1339 = vmatprep.subr.mxu0 0.0
        %v1340 = vand.u32 %v258, 4294901760
        %1341 = vmatpush1.msra.mxu0 %v1340
        %1342 = vmatprep.subr.mxu0 0.0
        %v1343 = vand.u32 %v259, 4294901760
        %1344 = vmatpush1.msra.mxu0 %v1343
        %1345 = vmatprep.subr.mxu0 0.0
        %v1346 = vand.u32 %v260, 4294901760
        %1347 = vmatpush1.msra.mxu0 %v1346
        %1348 = vmatprep.subr.mxu0 0.0
        %v1349 = vand.u32 %v261, 4294901760
        %1350 = vmatpush1.msra.mxu0 %v1349
        %1351 = vmatprep.subr.mxu0 0.0
        %v1352 = vand.u32 %v262, 4294901760
        %1353 = vmatpush1.msra.mxu0 %v1352
        %1354 = vmatprep.subr.mxu0 0.0
        %v1355 = vand.u32 %v263, 4294901760
        %1356 = vmatpush1.msra.mxu0 %v1355
        %1357 = vmatprep.subr.mxu0 0.0
        %1358 = vmatpush1.msra.mxu0 0.0
        %1359 = vmatprep.subr.mxu0 0.0
        %1360 = vmatpush1.msra.mxu0 0.0
        %1361 = vmatprep.subr.mxu0 0.0
        %1362 = vmatpush1.msra.mxu0 0.0
        %1363 = vmatprep.subr.mxu0 0.0
        %1364 = vmatpush1.msra.mxu0 0.0
        %1365 = vmatprep.subr.mxu0 0.0
        %1366 = vmatpush1.msra.mxu0 0.0
        %1367 = vmatprep.subr.mxu0 0.0
        %1368 = vmatpush1.msra.mxu0 0.0
        %1369 = vmatprep.subr.mxu0 0.0
        %1370 = vmatpush1.msra.mxu0 0.0
        %1371 = vmatprep.subr.mxu0 0.0
        %1372 = vmatpush1.msra.mxu0 0.0
        %1373 = vmatprep.subr.mxu0 0.0
        %1374 = vmatpush1.msra.mxu0 0.0
        %1375 = vmatprep.subr.mxu0 0.0
        %1376 = vmatpush1.msra.mxu0 0.0
        %1377 = vmatprep.subr.mxu0 0.0
        %1378 = vmatpush1.msra.mxu0 0.0
        %1379 = vmatprep.subr.mxu0 0.0
        %1380 = vmatpush1.msra.mxu0 0.0
        %1381 = vmatprep.subr.mxu0 0.0
        %1382 = vmatpush1.msra.mxu0 0.0
        %1383 = vmatprep.subr.mxu0 0.0
        %1384 = vmatpush1.msra.mxu0 0.0
        %1385 = vmatprep.subr.mxu0 0.0
        %1386 = vmatpush1.msra.mxu0 0.0
        %1387 = vmatprep.subr.mxu0 0.0
        %1388 = vmatpush1.msra.mxu0 0.0
        %1389 = vmatprep.subr.mxu0 0.0
        %1390 = vmatpush1.msra.mxu0 0.0
        %1391 = vmatprep.subr.mxu0 0.0
        %1392 = vmatpush1.msra.mxu0 0.0
        %1393 = vmatprep.subr.mxu0 0.0
        %1394 = vmatpush1.msra.mxu0 0.0
        %1395 = vmatprep.subr.mxu0 0.0
        %1396 = vmatpush1.msra.mxu0 0.0
        %1397 = vmatprep.subr.mxu0 0.0
        %1398 = vmatpush1.msra.mxu0 0.0
        %1399 = vmatprep.subr.mxu0 0.0
        %1400 = vmatpush1.msra.mxu0 0.0
        %1401 = vmatprep.subr.mxu0 0.0
        %1402 = vmatpush1.msra.mxu0 0.0
        %1403 = vmatprep.subr.mxu0 0.0
        %1404 = vmatpush1.msra.mxu0 0.0
        %1405 = vmatprep.subr.mxu0 0.0
        %1406 = vmatpush1.msra.mxu0 0.0
        %1407 = vmatprep.subr.mxu0 0.0
        %1408 = vmatpush1.msra.mxu0 0.0
        %1409 = vmatprep.mubr.f32.mxu0 0.0
        %v1410 = vand.u32 %v1334, 4294901760
        %v1411 = vsub.f32 %v1334, %v1410
        %v1412 = vand.u32 %v1411, 4294901760
        %v1413 = vsub.f32 %v1411, %v1412
        %v1414 = vand.u32 %v1413, 4294901760
        %1415 = vmatmul.mubr.f32.gmra.mrb[0].mxu0 %v1414
        %v1416 = vpop.f32.mrb[0].mxu0
        %v1417 = vadd.f32 0.0, %v1416
        %v1418 = vpop.f32.mrb[0].mxu0
        %1419 = vmatprep.mubr.f32.mxu0 0.0
        %v1420 = vand.u32 %v1337, 4294901760
        %v1421 = vsub.f32 %v1337, %v1420
        %v1422 = vand.u32 %v1421, 4294901760
        %v1423 = vsub.f32 %v1421, %v1422
        %v1424 = vand.u32 %v1423, 4294901760
        %1425 = vmatmul.mubr.f32.gmra.mrb[0].mxu0 %v1424
        %v1426 = vpop.f32.mrb[0].mxu0
        %v1427 = vadd.f32 0.0, %v1426
        %v1428 = vpop.f32.mrb[0].mxu0
        %1429 = vdwg.mxu0
        %1430 = vmatprep.subr.mxu0 0.0
        %v1431 = vand.u32 %v258, 4294901760
        %v1432 = vsub.f32 %v258, %v1431
        %v1433 = vand.u32 %v1432, 4294901760
        %v1434 = vsub.f32 %v1432, %v1433
        %v1435 = vand.u32 %v1434, 4294901760
        %1436 = vmatpush1.msra.mxu0 %v1435
        %1437 = vmatprep.subr.mxu0 0.0
        %v1438 = vand.u32 %v259, 4294901760
        %v1439 = vsub.f32 %v259, %v1438
        %v1440 = vand.u32 %v1439, 4294901760
        %v1441 = vsub.f32 %v1439, %v1440
        %v1442 = vand.u32 %v1441, 4294901760
        %1443 = vmatpush1.msra.mxu0 %v1442
        %1444 = vmatprep.subr.mxu0 0.0
        %v1445 = vand.u32 %v260, 4294901760
        %v1446 = vsub.f32 %v260, %v1445
        %v1447 = vand.u32 %v1446, 4294901760
        %v1448 = vsub.f32 %v1446, %v1447
        %v1449 = vand.u32 %v1448, 4294901760
        %1450 = vmatpush1.msra.mxu0 %v1449
        %1451 = vmatprep.subr.mxu0 0.0
        %v1452 = vand.u32 %v261, 4294901760
        %v1453 = vsub.f32 %v261, %v1452
        %v1454 = vand.u32 %v1453, 4294901760
        %v1455 = vsub.f32 %v1453, %v1454
        %v1456 = vand.u32 %v1455, 4294901760
        %1457 = vmatpush1.msra.mxu0 %v1456
        %1458 = vmatprep.subr.mxu0 0.0
        %v1459 = vand.u32 %v262, 4294901760
        %v1460 = vsub.f32 %v262, %v1459
        %v1461 = vand.u32 %v1460, 4294901760
        %v1462 = vsub.f32 %v1460, %v1461
        %v1463 = vand.u32 %v1462, 4294901760
        %1464 = vmatpush1.msra.mxu0 %v1463
        %1465 = vmatprep.subr.mxu0 0.0
        %v1466 = vand.u32 %v263, 4294901760
        %v1467 = vsub.f32 %v263, %v1466
        %v1468 = vand.u32 %v1467, 4294901760
        %v1469 = vsub.f32 %v1467, %v1468
        %v1470 = vand.u32 %v1469, 4294901760
        %1471 = vmatpush1.msra.mxu0 %v1470
        %1472 = vmatprep.subr.mxu0 0.0
        %1473 = vmatpush1.msra.mxu0 0.0
        %1474 = vmatprep.subr.mxu0 0.0
        %1475 = vmatpush1.msra.mxu0 0.0
        %1476 = vmatprep.subr.mxu0 0.0
        %1477 = vmatpush1.msra.mxu0 0.0
        %1478 = vmatprep.subr.mxu0 0.0
        %1479 = vmatpush1.msra.mxu0 0.0
        %1480 = vmatprep.subr.mxu0 0.0
        %1481 = vmatpush1.msra.mxu0 0.0
        %1482 = vmatprep.subr.mxu0 0.0
        %1483 = vmatpush1.msra.mxu0 0.0
        %1484 = vmatprep.subr.mxu0 0.0
        %1485 = vmatpush1.msra.mxu0 0.0
        %1486 = vmatprep.subr.mxu0 0.0
        %1487 = vmatpush1.msra.mxu0 0.0
        %1488 = vmatprep.subr.mxu0 0.0
        %1489 = vmatpush1.msra.mxu0 0.0
        %1490 = vmatprep.subr.mxu0 0.0
        %1491 = vmatpush1.msra.mxu0 0.0
        %1492 = vmatprep.subr.mxu0 0.0
        %1493 = vmatpush1.msra.mxu0 0.0
        %1494 = vmatprep.subr.mxu0 0.0
        %1495 = vmatpush1.msra.mxu0 0.0
        %1496 = vmatprep.subr.mxu0 0.0
        %1497 = vmatpush1.msra.mxu0 0.0
        %1498 = vmatprep.subr.mxu0 0.0
        %1499 = vmatpush1.msra.mxu0 0.0
        %1500 = vmatprep.subr.mxu0 0.0
        %1501 = vmatpush1.msra.mxu0 0.0
        %1502 = vmatprep.subr.mxu0 0.0
        %1503 = vmatpush1.msra.mxu0 0.0
        %1504 = vmatprep.subr.mxu0 0.0
        %1505 = vmatpush1.msra.mxu0 0.0
        %1506 = vmatprep.subr.mxu0 0.0
        %1507 = vmatpush1.msra.mxu0 0.0
        %1508 = vmatprep.subr.mxu0 0.0
        %1509 = vmatpush1.msra.mxu0 0.0
        %1510 = vmatprep.subr.mxu0 0.0
        %1511 = vmatpush1.msra.mxu0 0.0
        %1512 = vmatprep.subr.mxu0 0.0
        %1513 = vmatpush1.msra.mxu0 0.0
        %1514 = vmatprep.subr.mxu0 0.0
        %1515 = vmatpush1.msra.mxu0 0.0
        %1516 = vmatprep.subr.mxu0 0.0
        %1517 = vmatpush1.msra.mxu0 0.0
        %1518 = vmatprep.subr.mxu0 0.0
        %1519 = vmatpush1.msra.mxu0 0.0
        %1520 = vmatprep.subr.mxu0 0.0
        %1521 = vmatpush1.msra.mxu0 0.0
        %1522 = vmatprep.subr.mxu0 0.0
        %1523 = vmatpush1.msra.mxu0 0.0
        %1524 = vmatprep.mubr.f32.mxu0 0.0
        %v1525 = vand.u32 %v1334, 4294901760
        %1526 = vmatmul.mubr.f32.gmra.mrb[0].mxu0 %v1525
        %v1527 = vpop.f32.mrb[0].mxu0
        %v1528 = vadd.f32 %v1417, %v1527
        %v1529 = vpop.f32.mrb[0].mxu0
        %1530 = vmatprep.mubr.f32.mxu0 0.0
        %v1531 = vand.u32 %v1337, 4294901760
        %1532 = vmatmul.mubr.f32.gmra.mrb[0].mxu0 %v1531
        %v1533 = vpop.f32.mrb[0].mxu0
        %v1534 = vadd.f32 %v1427, %v1533
        %v1535 = vpop.f32.mrb[0].mxu0
        %1536 = vdwg.mxu0
        %1537 = vmatprep.subr.mxu0 0.0
        %v1538 = vand.u32 %v258, 4294901760
        %v1539 = vsub.f32 %v258, %v1538
        %1540 = vmatpush1.msra.mxu0 %v1539
        %1541 = vmatprep.subr.mxu0 0.0
        %v1542 = vand.u32 %v259, 4294901760
        %v1543 = vsub.f32 %v259, %v1542
        %1544 = vmatpush1.msra.mxu0 %v1543
        %1545 = vmatprep.subr.mxu0 0.0
        %v1546 = vand.u32 %v260, 4294901760
        %v1547 = vsub.f32 %v260, %v1546
        %1548 = vmatpush1.msra.mxu0 %v1547
        %1549 = vmatprep.subr.mxu0 0.0
        %v1550 = vand.u32 %v261, 4294901760
        %v1551 = vsub.f32 %v261, %v1550
        %1552 = vmatpush1.msra.mxu0 %v1551
        %1553 = vmatprep.subr.mxu0 0.0
        %v1554 = vand.u32 %v262, 4294901760
        %v1555 = vsub.f32 %v262, %v1554
        %1556 = vmatpush1.msra.mxu0 %v1555
        %1557 = vmatprep.subr.mxu0 0.0
        %v1558 = vand.u32 %v263, 4294901760
        %v1559 = vsub.f32 %v263, %v1558
        %1560 = vmatpush1.msra.mxu0 %v1559
        %1561 = vmatprep.subr.mxu0 0.0
        %1562 = vmatpush1.msra.mxu0 0.0
        %1563 = vmatprep.subr.mxu0 0.0
        %1564 = vmatpush1.msra.mxu0 0.0
        %1565 = vmatprep.subr.mxu0 0.0
        %1566 = vmatpush1.msra.mxu0 0.0
        %1567 = vmatprep.subr.mxu0 0.0
        %1568 = vmatpush1.msra.mxu0 0.0
        %1569 = vmatprep.subr.mxu0 0.0
        %1570 = vmatpush1.msra.mxu0 0.0
        %1571 = vmatprep.subr.mxu0 0.0
        %1572 = vmatpush1.msra.mxu0 0.0
        %1573 = vmatprep.subr.mxu0 0.0
        %1574 = vmatpush1.msra.mxu0 0.0
        %1575 = vmatprep.subr.mxu0 0.0
        %1576 = vmatpush1.msra.mxu0 0.0
        %1577 = vmatprep.subr.mxu0 0.0
        %1578 = vmatpush1.msra.mxu0 0.0
        %1579 = vmatprep.subr.mxu0 0.0
        %1580 = vmatpush1.msra.mxu0 0.0
        %1581 = vmatprep.subr.mxu0 0.0
        %1582 = vmatpush1.msra.mxu0 0.0
        %1583 = vmatprep.subr.mxu0 0.0
        %1584 = vmatpush1.msra.mxu0 0.0
        %1585 = vmatprep.subr.mxu0 0.0
        %1586 = vmatpush1.msra.mxu0 0.0
        %1587 = vmatprep.subr.mxu0 0.0
        %1588 = vmatpush1.msra.mxu0 0.0
        %1589 = vmatprep.subr.mxu0 0.0
        %1590 = vmatpush1.msra.mxu0 0.0
        %1591 = vmatprep.subr.mxu0 0.0
        %1592 = vmatpush1.msra.mxu0 0.0
        %1593 = vmatprep.subr.mxu0 0.0
        %1594 = vmatpush1.msra.mxu0 0.0
        %1595 = vmatprep.subr.mxu0 0.0
        %1596 = vmatpush1.msra.mxu0 0.0
        %1597 = vmatprep.subr.mxu0 0.0
        %1598 = vmatpush1.msra.mxu0 0.0
        %1599 = vmatprep.subr.mxu0 0.0
        %1600 = vmatpush1.msra.mxu0 0.0
        %1601 = vmatprep.subr.mxu0 0.0
        %1602 = vmatpush1.msra.mxu0 0.0
        %1603 = vmatprep.subr.mxu0 0.0
        %1604 = vmatpush1.msra.mxu0 0.0
        %1605 = vmatprep.subr.mxu0 0.0
        %1606 = vmatpush1.msra.mxu0 0.0
        %1607 = vmatprep.subr.mxu0 0.0
        %1608 = vmatpush1.msra.mxu0 0.0
        %1609 = vmatprep.subr.mxu0 0.0
        %1610 = vmatpush1.msra.mxu0 0.0
        %1611 = vmatprep.subr.mxu0 0.0
        %1612 = vmatpush1.msra.mxu0 0.0
        %1613 = vmatprep.mubr.f32.mxu0 0.0
        %v1614 = vand.u32 %v1334, 4294901760
        %v1615 = vsub.f32 %v1334, %v1614
        %1616 = vmatmul.mubr.f32.gmra.mrb[0].mxu0 %v1615
        %v1617 = vpop.f32.mrb[0].mxu0
        %v1618 = vadd.f32 %v1528, %v1617
        %v1619 = vpop.f32.mrb[0].mxu0
        %1620 = vmatprep.mubr.f32.mxu0 0.0
        %v1621 = vand.u32 %v1337, 4294901760
        %v1622 = vsub.f32 %v1337, %v1621
        %1623 = vmatmul.mubr.f32.gmra.mrb[0].mxu0 %v1622
        %v1624 = vpop.f32.mrb[0].mxu0
        %v1625 = vadd.f32 %v1534, %v1624
        %v1626 = vpop.f32.mrb[0].mxu0
        %1627 = vdwg.mxu0
        %1628 = vmatprep.subr.mxu0 0.0
        %v1629 = vand.u32 %v258, 4294901760
        %1630 = vmatpush1.msra.mxu0 %v1629
        %1631 = vmatprep.subr.mxu0 0.0
        %v1632 = vand.u32 %v259, 4294901760
        %1633 = vmatpush1.msra.mxu0 %v1632
        %1634 = vmatprep.subr.mxu0 0.0
        %v1635 = vand.u32 %v260, 4294901760
        %1636 = vmatpush1.msra.mxu0 %v1635
        %1637 = vmatprep.subr.mxu0 0.0
        %v1638 = vand.u32 %v261, 4294901760
        %1639 = vmatpush1.msra.mxu0 %v1638
        %1640 = vmatprep.subr.mxu0 0.0
        %v1641 = vand.u32 %v262, 4294901760
        %1642 = vmatpush1.msra.mxu0 %v1641
        %1643 = vmatprep.subr.mxu0 0.0
        %v1644 = vand.u32 %v263, 4294901760
        %1645 = vmatpush1.msra.mxu0 %v1644
        %1646 = vmatprep.subr.mxu0 0.0
        %1647 = vmatpush1.msra.mxu0 0.0
        %1648 = vmatprep.subr.mxu0 0.0
        %1649 = vmatpush1.msra.mxu0 0.0
        %1650 = vmatprep.subr.mxu0 0.0
        %1651 = vmatpush1.msra.mxu0 0.0
        %1652 = vmatprep.subr.mxu0 0.0
        %1653 = vmatpush1.msra.mxu0 0.0
        %1654 = vmatprep.subr.mxu0 0.0
        %1655 = vmatpush1.msra.mxu0 0.0
        %1656 = vmatprep.subr.mxu0 0.0
        %1657 = vmatpush1.msra.mxu0 0.0
        %1658 = vmatprep.subr.mxu0 0.0
        %1659 = vmatpush1.msra.mxu0 0.0
        %1660 = vmatprep.subr.mxu0 0.0
        %1661 = vmatpush1.msra.mxu0 0.0
        %1662 = vmatprep.subr.mxu0 0.0
        %1663 = vmatpush1.msra.mxu0 0.0
        %1664 = vmatprep.subr.mxu0 0.0
        %1665 = vmatpush1.msra.mxu0 0.0
        %1666 = vmatprep.subr.mxu0 0.0
        %1667 = vmatpush1.msra.mxu0 0.0
        %1668 = vmatprep.subr.mxu0 0.0
        %1669 = vmatpush1.msra.mxu0 0.0
        %1670 = vmatprep.subr.mxu0 0.0
        %1671 = vmatpush1.msra.mxu0 0.0
        %1672 = vmatprep.subr.mxu0 0.0
        %1673 = vmatpush1.msra.mxu0 0.0
        %1674 = vmatprep.subr.mxu0 0.0
        %1675 = vmatpush1.msra.mxu0 0.0
        %1676 = vmatprep.subr.mxu0 0.0
        %1677 = vmatpush1.msra.mxu0 0.0
        %1678 = vmatprep.subr.mxu0 0.0
        %1679 = vmatpush1.msra.mxu0 0.0
        %1680 = vmatprep.subr.mxu0 0.0
        %1681 = vmatpush1.msra.mxu0 0.0
        %1682 = vmatprep.subr.mxu0 0.0
        %1683 = vmatpush1.msra.mxu0 0.0
        %1684 = vmatprep.subr.mxu0 0.0
        %1685 = vmatpush1.msra.mxu0 0.0
        %1686 = vmatprep.subr.mxu0 0.0
        %1687 = vmatpush1.msra.mxu0 0.0
        %1688 = vmatprep.subr.mxu0 0.0
        %1689 = vmatpush1.msra.mxu0 0.0
        %1690 = vmatprep.subr.mxu0 0.0
        %1691 = vmatpush1.msra.mxu0 0.0
        %1692 = vmatprep.subr.mxu0 0.0
        %1693 = vmatpush1.msra.mxu0 0.0
        %1694 = vmatprep.subr.mxu0 0.0
        %1695 = vmatpush1.msra.mxu0 0.0
        %1696 = vmatprep.subr.mxu0 0.0
        %1697 = vmatpush1.msra.mxu0 0.0
        %1698 = vmatprep.mubr.f32.mxu0 0.0
        %v1699 = vand.u32 %v1334, 4294901760
        %v1700 = vsub.f32 %v1334, %v1699
        %v1701 = vand.u32 %v1700, 4294901760
        %1702 = vmatmul.mubr.f32.gmra.mrb[0].mxu0 %v1701
        %v1703 = vpop.f32.mrb[0].mxu0
        %v1704 = vadd.f32 %v1618, %v1703
        %v1705 = vpop.f32.mrb[0].mxu0
        %1706 = vmatprep.mubr.f32.mxu0 0.0
        %v1707 = vand.u32 %v1337, 4294901760
        %v1708 = vsub.f32 %v1337, %v1707
        %v1709 = vand.u32 %v1708, 4294901760
        %1710 = vmatmul.mubr.f32.gmra.mrb[0].mxu0 %v1709
        %v1711 = vpop.f32.mrb[0].mxu0
        %v1712 = vadd.f32 %v1625, %v1711
        %v1713 = vpop.f32.mrb[0].mxu0
        %1714 = vdwg.mxu0
        %1715 = vmatprep.subr.mxu0 0.0
        %v1716 = vand.u32 %v258, 4294901760
        %v1717 = vsub.f32 %v258, %v1716
        %v1718 = vand.u32 %v1717, 4294901760
        %1719 = vmatpush1.msra.mxu0 %v1718
        %1720 = vmatprep.subr.mxu0 0.0
        %v1721 = vand.u32 %v259, 4294901760
        %v1722 = vsub.f32 %v259, %v1721
        %v1723 = vand.u32 %v1722, 4294901760
        %1724 = vmatpush1.msra.mxu0 %v1723
        %1725 = vmatprep.subr.mxu0 0.0
        %v1726 = vand.u32 %v260, 4294901760
        %v1727 = vsub.f32 %v260, %v1726
        %v1728 = vand.u32 %v1727, 4294901760
        %1729 = vmatpush1.msra.mxu0 %v1728
        %1730 = vmatprep.subr.mxu0 0.0
        %v1731 = vand.u32 %v261, 4294901760
        %v1732 = vsub.f32 %v261, %v1731
        %v1733 = vand.u32 %v1732, 4294901760
        %1734 = vmatpush1.msra.mxu0 %v1733
        %1735 = vmatprep.subr.mxu0 0.0
        %v1736 = vand.u32 %v262, 4294901760
        %v1737 = vsub.f32 %v262, %v1736
        %v1738 = vand.u32 %v1737, 4294901760
        %1739 = vmatpush1.msra.mxu0 %v1738
        %1740 = vmatprep.subr.mxu0 0.0
        %v1741 = vand.u32 %v263, 4294901760
        %v1742 = vsub.f32 %v263, %v1741
        %v1743 = vand.u32 %v1742, 4294901760
        %1744 = vmatpush1.msra.mxu0 %v1743
        %1745 = vmatprep.subr.mxu0 0.0
        %1746 = vmatpush1.msra.mxu0 0.0
        %1747 = vmatprep.subr.mxu0 0.0
        %1748 = vmatpush1.msra.mxu0 0.0
        %1749 = vmatprep.subr.mxu0 0.0
        %1750 = vmatpush1.msra.mxu0 0.0
        %1751 = vmatprep.subr.mxu0 0.0
        %1752 = vmatpush1.msra.mxu0 0.0
        %1753 = vmatprep.subr.mxu0 0.0
        %1754 = vmatpush1.msra.mxu0 0.0
        %1755 = vmatprep.subr.mxu0 0.0
        %1756 = vmatpush1.msra.mxu0 0.0
        %1757 = vmatprep.subr.mxu0 0.0
        %1758 = vmatpush1.msra.mxu0 0.0
        %1759 = vmatprep.subr.mxu0 0.0
        %1760 = vmatpush1.msra.mxu0 0.0
        %1761 = vmatprep.subr.mxu0 0.0
        %1762 = vmatpush1.msra.mxu0 0.0
        %1763 = vmatprep.subr.mxu0 0.0
        %1764 = vmatpush1.msra.mxu0 0.0
        %1765 = vmatprep.subr.mxu0 0.0
        %1766 = vmatpush1.msra.mxu0 0.0
        %1767 = vmatprep.subr.mxu0 0.0
        %1768 = vmatpush1.msra.mxu0 0.0
        %1769 = vmatprep.subr.mxu0 0.0
        %1770 = vmatpush1.msra.mxu0 0.0
        %1771 = vmatprep.subr.mxu0 0.0
        %1772 = vmatpush1.msra.mxu0 0.0
        %1773 = vmatprep.subr.mxu0 0.0
        %1774 = vmatpush1.msra.mxu0 0.0
        %1775 = vmatprep.subr.mxu0 0.0
        %1776 = vmatpush1.msra.mxu0 0.0
        %1777 = vmatprep.subr.mxu0 0.0
        %1778 = vmatpush1.msra.mxu0 0.0
        %1779 = vmatprep.subr.mxu0 0.0
        %1780 = vmatpush1.msra.mxu0 0.0
        %1781 = vmatprep.subr.mxu0 0.0
        %1782 = vmatpush1.msra.mxu0 0.0
        %1783 = vmatprep.subr.mxu0 0.0
        %1784 = vmatpush1.msra.mxu0 0.0
        %1785 = vmatprep.subr.mxu0 0.0
        %1786 = vmatpush1.msra.mxu0 0.0
        %1787 = vmatprep.subr.mxu0 0.0
        %1788 = vmatpush1.msra.mxu0 0.0
        %1789 = vmatprep.subr.mxu0 0.0
        %1790 = vmatpush1.msra.mxu0 0.0
        %1791 = vmatprep.subr.mxu0 0.0
        %1792 = vmatpush1.msra.mxu0 0.0
        %1793 = vmatprep.subr.mxu0 0.0
        %1794 = vmatpush1.msra.mxu0 0.0
        %1795 = vmatprep.subr.mxu0 0.0
        %1796 = vmatpush1.msra.mxu0 0.0
        %1797 = vmatprep.mubr.f32.mxu0 0.0
        %v1798 = vand.u32 %v1334, 4294901760
        %1799 = vmatmul.mubr.f32.gmra.mrb[0].mxu0 %v1798
        %v1800 = vpop.f32.mrb[0].mxu0
        %v1801 = vadd.f32 %v1704, %v1800
        %v1802 = vpop.f32.mrb[0].mxu0
        %1803 = vmatprep.mubr.f32.mxu0 0.0
        %v1804 = vand.u32 %v1337, 4294901760
        %1805 = vmatmul.mubr.f32.gmra.mrb[0].mxu0 %v1804
        %v1806 = vpop.f32.mrb[0].mxu0
        %v1807 = vadd.f32 %v1712, %v1806
        %v1808 = vpop.f32.mrb[0].mxu0
        %1809 = vdwg.mxu0
        %1810 = vmatprep.subr.mxu0 0.0
        %v1811 = vand.u32 %v258, 4294901760
        %1812 = vmatpush1.msra.mxu0 %v1811
        %1813 = vmatprep.subr.mxu0 0.0
        %v1814 = vand.u32 %v259, 4294901760
        %1815 = vmatpush1.msra.mxu0 %v1814
        %1816 = vmatprep.subr.mxu0 0.0
        %v1817 = vand.u32 %v260, 4294901760
        %1818 = vmatpush1.msra.mxu0 %v1817
        %1819 = vmatprep.subr.mxu0 0.0
        %v1820 = vand.u32 %v261, 4294901760
        %1821 = vmatpush1.msra.mxu0 %v1820
        %1822 = vmatprep.subr.mxu0 0.0
        %v1823 = vand.u32 %v262, 4294901760
        %1824 = vmatpush1.msra.mxu0 %v1823
        %1825 = vmatprep.subr.mxu0 0.0
        %v1826 = vand.u32 %v263, 4294901760
        %1827 = vmatpush1.msra.mxu0 %v1826
        %1828 = vmatprep.subr.mxu0 0.0
        %1829 = vmatpush1.msra.mxu0 0.0
        %1830 = vmatprep.subr.mxu0 0.0
        %1831 = vmatpush1.msra.mxu0 0.0
        %1832 = vmatprep.subr.mxu0 0.0
        %1833 = vmatpush1.msra.mxu0 0.0
        %1834 = vmatprep.subr.mxu0 0.0
        %1835 = vmatpush1.msra.mxu0 0.0
        %1836 = vmatprep.subr.mxu0 0.0
        %1837 = vmatpush1.msra.mxu0 0.0
        %1838 = vmatprep.subr.mxu0 0.0
        %1839 = vmatpush1.msra.mxu0 0.0
        %1840 = vmatprep.subr.mxu0 0.0
        %1841 = vmatpush1.msra.mxu0 0.0
        %1842 = vmatprep.subr.mxu0 0.0
        %1843 = vmatpush1.msra.mxu0 0.0
        %1844 = vmatprep.subr.mxu0 0.0
        %1845 = vmatpush1.msra.mxu0 0.0
        %1846 = vmatprep.subr.mxu0 0.0
        %1847 = vmatpush1.msra.mxu0 0.0
        %1848 = vmatprep.subr.mxu0 0.0
        %1849 = vmatpush1.msra.mxu0 0.0
        %1850 = vmatprep.subr.mxu0 0.0
        %1851 = vmatpush1.msra.mxu0 0.0
        %1852 = vmatprep.subr.mxu0 0.0
        %1853 = vmatpush1.msra.mxu0 0.0
        %1854 = vmatprep.subr.mxu0 0.0
        %1855 = vmatpush1.msra.mxu0 0.0
        %1856 = vmatprep.subr.mxu0 0.0
        %1857 = vmatpush1.msra.mxu0 0.0
        %1858 = vmatprep.subr.mxu0 0.0
        %1859 = vmatpush1.msra.mxu0 0.0
        %1860 = vmatprep.subr.mxu0 0.0
        %1861 = vmatpush1.msra.mxu0 0.0
        %1862 = vmatprep.subr.mxu0 0.0
        %1863 = vmatpush1.msra.mxu0 0.0
        %1864 = vmatprep.subr.mxu0 0.0
        %1865 = vmatpush1.msra.mxu0 0.0
        %1866 = vmatprep.subr.mxu0 0.0
        %1867 = vmatpush1.msra.mxu0 0.0
        %1868 = vmatprep.subr.mxu0 0.0
        %1869 = vmatpush1.msra.mxu0 0.0
        %1870 = vmatprep.subr.mxu0 0.0
        %1871 = vmatpush1.msra.mxu0 0.0
        %1872 = vmatprep.subr.mxu0 0.0
        %1873 = vmatpush1.msra.mxu0 0.0
        %1874 = vmatprep.subr.mxu0 0.0
        %1875 = vmatpush1.msra.mxu0 0.0
        %1876 = vmatprep.subr.mxu0 0.0
        %1877 = vmatpush1.msra.mxu0 0.0
        %1878 = vmatprep.subr.mxu0 0.0
        %1879 = vmatpush1.msra.mxu0 0.0
        %1880 = vmatprep.mubr.f32.mxu0 0.0
        %v1881 = vand.u32 %v1334, 4294901760
        %1882 = vmatmul.mubr.f32.gmra.mrb[0].mxu0 %v1881
        %v1883 = vpop.f32.mrb[0].mxu0
        %v1884 = vadd.f32 %v1801, %v1883
        %v1885 = vpop.f32.mrb[0].mxu0
        %1886 = vmatprep.mubr.f32.mxu0 0.0
        %v1887 = vand.u32 %v1337, 4294901760
        %1888 = vmatmul.mubr.f32.gmra.mrb[0].mxu0 %v1887
        %v1889 = vpop.f32.mrb[0].mxu0
        %v1890 = vadd.f32 %v1807, %v1889
        %v1891 = vpop.f32.mrb[0].mxu0
        %1892 = vdwg.mxu0
        %v1894 = vsel %vm772, %v770, 0
        %v1897 = vsel %vm772, %v771, 0
        %1899 = vmatprep.subr.mxu0 0.0
        %v1900 = vand.u32 %v258, 4294901760
        %1901 = vmatpush1.msra.mxu0 %v1900
        %1902 = vmatprep.subr.mxu0 0.0
        %v1903 = vand.u32 %v259, 4294901760
        %1904 = vmatpush1.msra.mxu0 %v1903
        %1905 = vmatprep.subr.mxu0 0.0
        %v1906 = vand.u32 %v260, 4294901760
        %1907 = vmatpush1.msra.mxu0 %v1906
        %1908 = vmatprep.subr.mxu0 0.0
        %v1909 = vand.u32 %v261, 4294901760
        %1910 = vmatpush1.msra.mxu0 %v1909
        %1911 = vmatprep.subr.mxu0 0.0
        %v1912 = vand.u32 %v262, 4294901760
        %1913 = vmatpush1.msra.mxu0 %v1912
        %1914 = vmatprep.subr.mxu0 0.0
        %v1915 = vand.u32 %v263, 4294901760
        %1916 = vmatpush1.msra.mxu0 %v1915
        %1917 = vmatprep.subr.mxu0 0.0
        %1918 = vmatpush1.msra.mxu0 0.0
        %1919 = vmatprep.subr.mxu0 0.0
        %1920 = vmatpush1.msra.mxu0 0.0
        %1921 = vmatprep.subr.mxu0 0.0
        %1922 = vmatpush1.msra.mxu0 0.0
        %1923 = vmatprep.subr.mxu0 0.0
        %1924 = vmatpush1.msra.mxu0 0.0
        %1925 = vmatprep.subr.mxu0 0.0
        %1926 = vmatpush1.msra.mxu0 0.0
        %1927 = vmatprep.subr.mxu0 0.0
        %1928 = vmatpush1.msra.mxu0 0.0
        %1929 = vmatprep.subr.mxu0 0.0
        %1930 = vmatpush1.msra.mxu0 0.0
        %1931 = vmatprep.subr.mxu0 0.0
        %1932 = vmatpush1.msra.mxu0 0.0
        %1933 = vmatprep.subr.mxu0 0.0
        %1934 = vmatpush1.msra.mxu0 0.0
        %1935 = vmatprep.subr.mxu0 0.0
        %1936 = vmatpush1.msra.mxu0 0.0
        %1937 = vmatprep.subr.mxu0 0.0
        %1938 = vmatpush1.msra.mxu0 0.0
        %1939 = vmatprep.subr.mxu0 0.0
        %1940 = vmatpush1.msra.mxu0 0.0
        %1941 = vmatprep.subr.mxu0 0.0
        %1942 = vmatpush1.msra.mxu0 0.0
        %1943 = vmatprep.subr.mxu0 0.0
        %1944 = vmatpush1.msra.mxu0 0.0
        %1945 = vmatprep.subr.mxu0 0.0
        %1946 = vmatpush1.msra.mxu0 0.0
        %1947 = vmatprep.subr.mxu0 0.0
        %1948 = vmatpush1.msra.mxu0 0.0
        %1949 = vmatprep.subr.mxu0 0.0
        %1950 = vmatpush1.msra.mxu0 0.0
        %1951 = vmatprep.subr.mxu0 0.0
        %1952 = vmatpush1.msra.mxu0 0.0
        %1953 = vmatprep.subr.mxu0 0.0
        %1954 = vmatpush1.msra.mxu0 0.0
        %1955 = vmatprep.subr.mxu0 0.0
        %1956 = vmatpush1.msra.mxu0 0.0
        %1957 = vmatprep.subr.mxu0 0.0
        %1958 = vmatpush1.msra.mxu0 0.0
        %1959 = vmatprep.subr.mxu0 0.0
        %1960 = vmatpush1.msra.mxu0 0.0
        %1961 = vmatprep.subr.mxu0 0.0
        %1962 = vmatpush1.msra.mxu0 0.0
        %1963 = vmatprep.subr.mxu0 0.0
        %1964 = vmatpush1.msra.mxu0 0.0
        %1965 = vmatprep.subr.mxu0 0.0
        %1966 = vmatpush1.msra.mxu0 0.0
        %1967 = vmatprep.subr.mxu0 0.0
        %1968 = vmatpush1.msra.mxu0 0.0
        %1969 = vmatprep.mubr.f32.mxu0 0.0
        %v1970 = vand.u32 %v1894, 4294901760
        %v1971 = vsub.f32 %v1894, %v1970
        %v1972 = vand.u32 %v1971, 4294901760
        %v1973 = vsub.f32 %v1971, %v1972
        %v1974 = vand.u32 %v1973, 4294901760
        %1975 = vmatmul.mubr.f32.gmra.mrb[0].mxu0 %v1974
        %v1976 = vpop.f32.mrb[0].mxu0
        %v1977 = vadd.f32 0.0, %v1976
        %v1978 = vpop.f32.mrb[0].mxu0
        %1979 = vmatprep.mubr.f32.mxu0 0.0
        %v1980 = vand.u32 %v1897, 4294901760
        %v1981 = vsub.f32 %v1897, %v1980
        %v1982 = vand.u32 %v1981, 4294901760
        %v1983 = vsub.f32 %v1981, %v1982
        %v1984 = vand.u32 %v1983, 4294901760
        %1985 = vmatmul.mubr.f32.gmra.mrb[0].mxu0 %v1984
        %v1986 = vpop.f32.mrb[0].mxu0
        %v1987 = vadd.f32 0.0, %v1986
        %v1988 = vpop.f32.mrb[0].mxu0
        %1989 = vdwg.mxu0
        %1990 = vmatprep.subr.mxu0 0.0
        %v1991 = vand.u32 %v258, 4294901760
        %v1992 = vsub.f32 %v258, %v1991
        %v1993 = vand.u32 %v1992, 4294901760
        %v1994 = vsub.f32 %v1992, %v1993
        %v1995 = vand.u32 %v1994, 4294901760
        %1996 = vmatpush1.msra.mxu0 %v1995
        %1997 = vmatprep.subr.mxu0 0.0
        %v1998 = vand.u32 %v259, 4294901760
        %v1999 = vsub.f32 %v259, %v1998
        %v2000 = vand.u32 %v1999, 4294901760
        %v2001 = vsub.f32 %v1999, %v2000
        %v2002 = vand.u32 %v2001, 4294901760
        %2003 = vmatpush1.msra.mxu0 %v2002
        %2004 = vmatprep.subr.mxu0 0.0
        %v2005 = vand.u32 %v260, 4294901760
        %v2006 = vsub.f32 %v260, %v2005
        %v2007 = vand.u32 %v2006, 4294901760
        %v2008 = vsub.f32 %v2006, %v2007
        %v2009 = vand.u32 %v2008, 4294901760
        %2010 = vmatpush1.msra.mxu0 %v2009
        %2011 = vmatprep.subr.mxu0 0.0
        %v2012 = vand.u32 %v261, 4294901760
        %v2013 = vsub.f32 %v261, %v2012
        %v2014 = vand.u32 %v2013, 4294901760
        %v2015 = vsub.f32 %v2013, %v2014
        %v2016 = vand.u32 %v2015, 4294901760
        %2017 = vmatpush1.msra.mxu0 %v2016
        %2018 = vmatprep.subr.mxu0 0.0
        %v2019 = vand.u32 %v262, 4294901760
        %v2020 = vsub.f32 %v262, %v2019
        %v2021 = vand.u32 %v2020, 4294901760
        %v2022 = vsub.f32 %v2020, %v2021
        %v2023 = vand.u32 %v2022, 4294901760
        %2024 = vmatpush1.msra.mxu0 %v2023
        %2025 = vmatprep.subr.mxu0 0.0
        %v2026 = vand.u32 %v263, 4294901760
        %v2027 = vsub.f32 %v263, %v2026
        %v2028 = vand.u32 %v2027, 4294901760
        %v2029 = vsub.f32 %v2027, %v2028
        %v2030 = vand.u32 %v2029, 4294901760
        %2031 = vmatpush1.msra.mxu0 %v2030
        %2032 = vmatprep.subr.mxu0 0.0
        %2033 = vmatpush1.msra.mxu0 0.0
        %2034 = vmatprep.subr.mxu0 0.0
        %2035 = vmatpush1.msra.mxu0 0.0
        %2036 = vmatprep.subr.mxu0 0.0
        %2037 = vmatpush1.msra.mxu0 0.0
        %2038 = vmatprep.subr.mxu0 0.0
        %2039 = vmatpush1.msra.mxu0 0.0
        %2040 = vmatprep.subr.mxu0 0.0
        %2041 = vmatpush1.msra.mxu0 0.0
        %2042 = vmatprep.subr.mxu0 0.0
        %2043 = vmatpush1.msra.mxu0 0.0
        %2044 = vmatprep.subr.mxu0 0.0
        %2045 = vmatpush1.msra.mxu0 0.0
        %2046 = vmatprep.subr.mxu0 0.0
        %2047 = vmatpush1.msra.mxu0 0.0
        %2048 = vmatprep.subr.mxu0 0.0
        %2049 = vmatpush1.msra.mxu0 0.0
        %2050 = vmatprep.subr.mxu0 0.0
        %2051 = vmatpush1.msra.mxu0 0.0
        %2052 = vmatprep.subr.mxu0 0.0
        %2053 = vmatpush1.msra.mxu0 0.0
        %2054 = vmatprep.subr.mxu0 0.0
        %2055 = vmatpush1.msra.mxu0 0.0
        %2056 = vmatprep.subr.mxu0 0.0
        %2057 = vmatpush1.msra.mxu0 0.0
        %2058 = vmatprep.subr.mxu0 0.0
        %2059 = vmatpush1.msra.mxu0 0.0
        %2060 = vmatprep.subr.mxu0 0.0
        %2061 = vmatpush1.msra.mxu0 0.0
        %2062 = vmatprep.subr.mxu0 0.0
        %2063 = vmatpush1.msra.mxu0 0.0
        %2064 = vmatprep.subr.mxu0 0.0
        %2065 = vmatpush1.msra.mxu0 0.0
        %2066 = vmatprep.subr.mxu0 0.0
        %2067 = vmatpush1.msra.mxu0 0.0
        %2068 = vmatprep.subr.mxu0 0.0
        %2069 = vmatpush1.msra.mxu0 0.0
        %2070 = vmatprep.subr.mxu0 0.0
        %2071 = vmatpush1.msra.mxu0 0.0
        %2072 = vmatprep.subr.mxu0 0.0
        %2073 = vmatpush1.msra.mxu0 0.0
        %2074 = vmatprep.subr.mxu0 0.0
        %2075 = vmatpush1.msra.mxu0 0.0
        %2076 = vmatprep.subr.mxu0 0.0
        %2077 = vmatpush1.msra.mxu0 0.0
        %2078 = vmatprep.subr.mxu0 0.0
        %2079 = vmatpush1.msra.mxu0 0.0
        %2080 = vmatprep.subr.mxu0 0.0
        %2081 = vmatpush1.msra.mxu0 0.0
        %2082 = vmatprep.subr.mxu0 0.0
        %2083 = vmatpush1.msra.mxu0 0.0
        %2084 = vmatprep.mubr.f32.mxu0 0.0
        %v2085 = vand.u32 %v1894, 4294901760
        %2086 = vmatmul.mubr.f32.gmra.mrb[0].mxu0 %v2085
        %v2087 = vpop.f32.mrb[0].mxu0
        %v2088 = vadd.f32 %v1977, %v2087
        %v2089 = vpop.f32.mrb[0].mxu0
        %2090 = vmatprep.mubr.f32.mxu0 0.0
        %v2091 = vand.u32 %v1897, 4294901760
        %2092 = vmatmul.mubr.f32.gmra.mrb[0].mxu0 %v2091
        %v2093 = vpop.f32.mrb[0].mxu0
        %v2094 = vadd.f32 %v1987, %v2093
        %v2095 = vpop.f32.mrb[0].mxu0
        %2096 = vdwg.mxu0
        %2097 = vmatprep.subr.mxu0 0.0
        %v2098 = vand.u32 %v258, 4294901760
        %v2099 = vsub.f32 %v258, %v2098
        %2100 = vmatpush1.msra.mxu0 %v2099
        %2101 = vmatprep.subr.mxu0 0.0
        %v2102 = vand.u32 %v259, 4294901760
        %v2103 = vsub.f32 %v259, %v2102
        %2104 = vmatpush1.msra.mxu0 %v2103
        %2105 = vmatprep.subr.mxu0 0.0
        %v2106 = vand.u32 %v260, 4294901760
        %v2107 = vsub.f32 %v260, %v2106
        %2108 = vmatpush1.msra.mxu0 %v2107
        %2109 = vmatprep.subr.mxu0 0.0
        %v2110 = vand.u32 %v261, 4294901760
        %v2111 = vsub.f32 %v261, %v2110
        %2112 = vmatpush1.msra.mxu0 %v2111
        %2113 = vmatprep.subr.mxu0 0.0
        %v2114 = vand.u32 %v262, 4294901760
        %v2115 = vsub.f32 %v262, %v2114
        %2116 = vmatpush1.msra.mxu0 %v2115
        %2117 = vmatprep.subr.mxu0 0.0
        %v2118 = vand.u32 %v263, 4294901760
        %v2119 = vsub.f32 %v263, %v2118
        %2120 = vmatpush1.msra.mxu0 %v2119
        %2121 = vmatprep.subr.mxu0 0.0
        %2122 = vmatpush1.msra.mxu0 0.0
        %2123 = vmatprep.subr.mxu0 0.0
        %2124 = vmatpush1.msra.mxu0 0.0
        %2125 = vmatprep.subr.mxu0 0.0
        %2126 = vmatpush1.msra.mxu0 0.0
        %2127 = vmatprep.subr.mxu0 0.0
        %2128 = vmatpush1.msra.mxu0 0.0
        %2129 = vmatprep.subr.mxu0 0.0
        %2130 = vmatpush1.msra.mxu0 0.0
        %2131 = vmatprep.subr.mxu0 0.0
        %2132 = vmatpush1.msra.mxu0 0.0
        %2133 = vmatprep.subr.mxu0 0.0
        %2134 = vmatpush1.msra.mxu0 0.0
        %2135 = vmatprep.subr.mxu0 0.0
        %2136 = vmatpush1.msra.mxu0 0.0
        %2137 = vmatprep.subr.mxu0 0.0
        %2138 = vmatpush1.msra.mxu0 0.0
        %2139 = vmatprep.subr.mxu0 0.0
        %2140 = vmatpush1.msra.mxu0 0.0
        %2141 = vmatprep.subr.mxu0 0.0
        %2142 = vmatpush1.msra.mxu0 0.0
        %2143 = vmatprep.subr.mxu0 0.0
        %2144 = vmatpush1.msra.mxu0 0.0
        %2145 = vmatprep.subr.mxu0 0.0
        %2146 = vmatpush1.msra.mxu0 0.0
        %2147 = vmatprep.subr.mxu0 0.0
        %2148 = vmatpush1.msra.mxu0 0.0
        %2149 = vmatprep.subr.mxu0 0.0
        %2150 = vmatpush1.msra.mxu0 0.0
        %2151 = vmatprep.subr.mxu0 0.0
        %2152 = vmatpush1.msra.mxu0 0.0
        %2153 = vmatprep.subr.mxu0 0.0
        %2154 = vmatpush1.msra.mxu0 0.0
        %2155 = vmatprep.subr.mxu0 0.0
        %2156 = vmatpush1.msra.mxu0 0.0
        %2157 = vmatprep.subr.mxu0 0.0
        %2158 = vmatpush1.msra.mxu0 0.0
        %2159 = vmatprep.subr.mxu0 0.0
        %2160 = vmatpush1.msra.mxu0 0.0
        %2161 = vmatprep.subr.mxu0 0.0
        %2162 = vmatpush1.msra.mxu0 0.0
        %2163 = vmatprep.subr.mxu0 0.0
        %2164 = vmatpush1.msra.mxu0 0.0
        %2165 = vmatprep.subr.mxu0 0.0
        %2166 = vmatpush1.msra.mxu0 0.0
        %2167 = vmatprep.subr.mxu0 0.0
        %2168 = vmatpush1.msra.mxu0 0.0
        %2169 = vmatprep.subr.mxu0 0.0
        %2170 = vmatpush1.msra.mxu0 0.0
        %2171 = vmatprep.subr.mxu0 0.0
        %2172 = vmatpush1.msra.mxu0 0.0
        %2173 = vmatprep.mubr.f32.mxu0 0.0
        %v2174 = vand.u32 %v1894, 4294901760
        %v2175 = vsub.f32 %v1894, %v2174
        %2176 = vmatmul.mubr.f32.gmra.mrb[0].mxu0 %v2175
        %v2177 = vpop.f32.mrb[0].mxu0
        %v2178 = vadd.f32 %v2088, %v2177
        %v2179 = vpop.f32.mrb[0].mxu0
        %2180 = vmatprep.mubr.f32.mxu0 0.0
        %v2181 = vand.u32 %v1897, 4294901760
        %v2182 = vsub.f32 %v1897, %v2181
        %2183 = vmatmul.mubr.f32.gmra.mrb[0].mxu0 %v2182
        %v2184 = vpop.f32.mrb[0].mxu0
        %v2185 = vadd.f32 %v2094, %v2184
        %v2186 = vpop.f32.mrb[0].mxu0
        %2187 = vdwg.mxu0
        %2188 = vmatprep.subr.mxu0 0.0
        %v2189 = vand.u32 %v258, 4294901760
        %2190 = vmatpush1.msra.mxu0 %v2189
        %2191 = vmatprep.subr.mxu0 0.0
        %v2192 = vand.u32 %v259, 4294901760
        %2193 = vmatpush1.msra.mxu0 %v2192
        %2194 = vmatprep.subr.mxu0 0.0
        %v2195 = vand.u32 %v260, 4294901760
        %2196 = vmatpush1.msra.mxu0 %v2195
        %2197 = vmatprep.subr.mxu0 0.0
        %v2198 = vand.u32 %v261, 4294901760
        %2199 = vmatpush1.msra.mxu0 %v2198
        %2200 = vmatprep.subr.mxu0 0.0
        %v2201 = vand.u32 %v262, 4294901760
        %2202 = vmatpush1.msra.mxu0 %v2201
        %2203 = vmatprep.subr.mxu0 0.0
        %v2204 = vand.u32 %v263, 4294901760
        %2205 = vmatpush1.msra.mxu0 %v2204
        %2206 = vmatprep.subr.mxu0 0.0
        %2207 = vmatpush1.msra.mxu0 0.0
        %2208 = vmatprep.subr.mxu0 0.0
        %2209 = vmatpush1.msra.mxu0 0.0
        %2210 = vmatprep.subr.mxu0 0.0
        %2211 = vmatpush1.msra.mxu0 0.0
        %2212 = vmatprep.subr.mxu0 0.0
        %2213 = vmatpush1.msra.mxu0 0.0
        %2214 = vmatprep.subr.mxu0 0.0
        %2215 = vmatpush1.msra.mxu0 0.0
        %2216 = vmatprep.subr.mxu0 0.0
        %2217 = vmatpush1.msra.mxu0 0.0
        %2218 = vmatprep.subr.mxu0 0.0
        %2219 = vmatpush1.msra.mxu0 0.0
        %2220 = vmatprep.subr.mxu0 0.0
        %2221 = vmatpush1.msra.mxu0 0.0
        %2222 = vmatprep.subr.mxu0 0.0
        %2223 = vmatpush1.msra.mxu0 0.0
        %2224 = vmatprep.subr.mxu0 0.0
        %2225 = vmatpush1.msra.mxu0 0.0
        %2226 = vmatprep.subr.mxu0 0.0
        %2227 = vmatpush1.msra.mxu0 0.0
        %2228 = vmatprep.subr.mxu0 0.0
        %2229 = vmatpush1.msra.mxu0 0.0
        %2230 = vmatprep.subr.mxu0 0.0
        %2231 = vmatpush1.msra.mxu0 0.0
        %2232 = vmatprep.subr.mxu0 0.0
        %2233 = vmatpush1.msra.mxu0 0.0
        %2234 = vmatprep.subr.mxu0 0.0
        %2235 = vmatpush1.msra.mxu0 0.0
        %2236 = vmatprep.subr.mxu0 0.0
        %2237 = vmatpush1.msra.mxu0 0.0
        %2238 = vmatprep.subr.mxu0 0.0
        %2239 = vmatpush1.msra.mxu0 0.0
        %2240 = vmatprep.subr.mxu0 0.0
        %2241 = vmatpush1.msra.mxu0 0.0
        %2242 = vmatprep.subr.mxu0 0.0
        %2243 = vmatpush1.msra.mxu0 0.0
        %2244 = vmatprep.subr.mxu0 0.0
        %2245 = vmatpush1.msra.mxu0 0.0
        %2246 = vmatprep.subr.mxu0 0.0
        %2247 = vmatpush1.msra.mxu0 0.0
        %2248 = vmatprep.subr.mxu0 0.0
        %2249 = vmatpush1.msra.mxu0 0.0
        %2250 = vmatprep.subr.mxu0 0.0
        %2251 = vmatpush1.msra.mxu0 0.0
        %2252 = vmatprep.subr.mxu0 0.0
        %2253 = vmatpush1.msra.mxu0 0.0
        %2254 = vmatprep.subr.mxu0 0.0
        %2255 = vmatpush1.msra.mxu0 0.0
        %2256 = vmatprep.subr.mxu0 0.0
        %2257 = vmatpush1.msra.mxu0 0.0
        %2258 = vmatprep.mubr.f32.mxu0 0.0
        %v2259 = vand.u32 %v1894, 4294901760
        %v2260 = vsub.f32 %v1894, %v2259
        %v2261 = vand.u32 %v2260, 4294901760
        %2262 = vmatmul.mubr.f32.gmra.mrb[0].mxu0 %v2261
        %v2263 = vpop.f32.mrb[0].mxu0
        %v2264 = vadd.f32 %v2178, %v2263
        %v2265 = vpop.f32.mrb[0].mxu0
        %2266 = vmatprep.mubr.f32.mxu0 0.0
        %v2267 = vand.u32 %v1897, 4294901760
        %v2268 = vsub.f32 %v1897, %v2267
        %v2269 = vand.u32 %v2268, 4294901760
        %2270 = vmatmul.mubr.f32.gmra.mrb[0].mxu0 %v2269
        %v2271 = vpop.f32.mrb[0].mxu0
        %v2272 = vadd.f32 %v2185, %v2271
        %v2273 = vpop.f32.mrb[0].mxu0
        %2274 = vdwg.mxu0
        %2275 = vmatprep.subr.mxu0 0.0
        %v2276 = vand.u32 %v258, 4294901760
        %v2277 = vsub.f32 %v258, %v2276
        %v2278 = vand.u32 %v2277, 4294901760
        %2279 = vmatpush1.msra.mxu0 %v2278
        %2280 = vmatprep.subr.mxu0 0.0
        %v2281 = vand.u32 %v259, 4294901760
        %v2282 = vsub.f32 %v259, %v2281
        %v2283 = vand.u32 %v2282, 4294901760
        %2284 = vmatpush1.msra.mxu0 %v2283
        %2285 = vmatprep.subr.mxu0 0.0
        %v2286 = vand.u32 %v260, 4294901760
        %v2287 = vsub.f32 %v260, %v2286
        %v2288 = vand.u32 %v2287, 4294901760
        %2289 = vmatpush1.msra.mxu0 %v2288
        %2290 = vmatprep.subr.mxu0 0.0
        %v2291 = vand.u32 %v261, 4294901760
        %v2292 = vsub.f32 %v261, %v2291
        %v2293 = vand.u32 %v2292, 4294901760
        %2294 = vmatpush1.msra.mxu0 %v2293
        %2295 = vmatprep.subr.mxu0 0.0
        %v2296 = vand.u32 %v262, 4294901760
        %v2297 = vsub.f32 %v262, %v2296
        %v2298 = vand.u32 %v2297, 4294901760
        %2299 = vmatpush1.msra.mxu0 %v2298
        %2300 = vmatprep.subr.mxu0 0.0
        %v2301 = vand.u32 %v263, 4294901760
        %v2302 = vsub.f32 %v263, %v2301
        %v2303 = vand.u32 %v2302, 4294901760
        %2304 = vmatpush1.msra.mxu0 %v2303
        %2305 = vmatprep.subr.mxu0 0.0
        %2306 = vmatpush1.msra.mxu0 0.0
        %2307 = vmatprep.subr.mxu0 0.0
        %2308 = vmatpush1.msra.mxu0 0.0
        %2309 = vmatprep.subr.mxu0 0.0
        %2310 = vmatpush1.msra.mxu0 0.0
        %2311 = vmatprep.subr.mxu0 0.0
        %2312 = vmatpush1.msra.mxu0 0.0
        %2313 = vmatprep.subr.mxu0 0.0
        %2314 = vmatpush1.msra.mxu0 0.0
        %2315 = vmatprep.subr.mxu0 0.0
        %2316 = vmatpush1.msra.mxu0 0.0
        %2317 = vmatprep.subr.mxu0 0.0
        %2318 = vmatpush1.msra.mxu0 0.0
        %2319 = vmatprep.subr.mxu0 0.0
        %2320 = vmatpush1.msra.mxu0 0.0
        %2321 = vmatprep.subr.mxu0 0.0
        %2322 = vmatpush1.msra.mxu0 0.0
        %2323 = vmatprep.subr.mxu0 0.0
        %2324 = vmatpush1.msra.mxu0 0.0
        %2325 = vmatprep.subr.mxu0 0.0
        %2326 = vmatpush1.msra.mxu0 0.0
        %2327 = vmatprep.subr.mxu0 0.0
        %2328 = vmatpush1.msra.mxu0 0.0
        %2329 = vmatprep.subr.mxu0 0.0
        %2330 = vmatpush1.msra.mxu0 0.0
        %2331 = vmatprep.subr.mxu0 0.0
        %2332 = vmatpush1.msra.mxu0 0.0
        %2333 = vmatprep.subr.mxu0 0.0
        %2334 = vmatpush1.msra.mxu0 0.0
        %2335 = vmatprep.subr.mxu0 0.0
        %2336 = vmatpush1.msra.mxu0 0.0
        %2337 = vmatprep.subr.mxu0 0.0
        %2338 = vmatpush1.msra.mxu0 0.0
        %2339 = vmatprep.subr.mxu0 0.0
        %2340 = vmatpush1.msra.mxu0 0.0
        %2341 = vmatprep.subr.mxu0 0.0
        %2342 = vmatpush1.msra.mxu0 0.0
        %2343 = vmatprep.subr.mxu0 0.0
        %2344 = vmatpush1.msra.mxu0 0.0
        %2345 = vmatprep.subr.mxu0 0.0
        %2346 = vmatpush1.msra.mxu0 0.0
        %2347 = vmatprep.subr.mxu0 0.0
        %2348 = vmatpush1.msra.mxu0 0.0
        %2349 = vmatprep.subr.mxu0 0.0
        %2350 = vmatpush1.msra.mxu0 0.0
        %2351 = vmatprep.subr.mxu0 0.0
        %2352 = vmatpush1.msra.mxu0 0.0
        %2353 = vmatprep.subr.mxu0 0.0
        %2354 = vmatpush1.msra.mxu0 0.0
        %2355 = vmatprep.subr.mxu0 0.0
        %2356 = vmatpush1.msra.mxu0 0.0
        %2357 = vmatprep.mubr.f32.mxu0 0.0
        %v2358 = vand.u32 %v1894, 4294901760
        %2359 = vmatmul.mubr.f32.gmra.mrb[0].mxu0 %v2358
        %v2360 = vpop.f32.mrb[0].mxu0
        %v2361 = vadd.f32 %v2264, %v2360
        %v2362 = vpop.f32.mrb[0].mxu0
        %2363 = vmatprep.mubr.f32.mxu0 0.0
        %v2364 = vand.u32 %v1897, 4294901760
        %2365 = vmatmul.mubr.f32.gmra.mrb[0].mxu0 %v2364
        %v2366 = vpop.f32.mrb[0].mxu0
        %v2367 = vadd.f32 %v2272, %v2366
        %v2368 = vpop.f32.mrb[0].mxu0
        %2369 = vdwg.mxu0
        %2370 = vmatprep.subr.mxu0 0.0
        %v2371 = vand.u32 %v258, 4294901760
        %2372 = vmatpush1.msra.mxu0 %v2371
        %2373 = vmatprep.subr.mxu0 0.0
        %v2374 = vand.u32 %v259, 4294901760
        %2375 = vmatpush1.msra.mxu0 %v2374
        %2376 = vmatprep.subr.mxu0 0.0
        %v2377 = vand.u32 %v260, 4294901760
        %2378 = vmatpush1.msra.mxu0 %v2377
        %2379 = vmatprep.subr.mxu0 0.0
        %v2380 = vand.u32 %v261, 4294901760
        %2381 = vmatpush1.msra.mxu0 %v2380
        %2382 = vmatprep.subr.mxu0 0.0
        %v2383 = vand.u32 %v262, 4294901760
        %2384 = vmatpush1.msra.mxu0 %v2383
        %2385 = vmatprep.subr.mxu0 0.0
        %v2386 = vand.u32 %v263, 4294901760
        %2387 = vmatpush1.msra.mxu0 %v2386
        %2388 = vmatprep.subr.mxu0 0.0
        %2389 = vmatpush1.msra.mxu0 0.0
        %2390 = vmatprep.subr.mxu0 0.0
        %2391 = vmatpush1.msra.mxu0 0.0
        %2392 = vmatprep.subr.mxu0 0.0
        %2393 = vmatpush1.msra.mxu0 0.0
        %2394 = vmatprep.subr.mxu0 0.0
        %2395 = vmatpush1.msra.mxu0 0.0
        %2396 = vmatprep.subr.mxu0 0.0
        %2397 = vmatpush1.msra.mxu0 0.0
        %2398 = vmatprep.subr.mxu0 0.0
        %2399 = vmatpush1.msra.mxu0 0.0
        %2400 = vmatprep.subr.mxu0 0.0
        %2401 = vmatpush1.msra.mxu0 0.0
        %2402 = vmatprep.subr.mxu0 0.0
        %2403 = vmatpush1.msra.mxu0 0.0
        %2404 = vmatprep.subr.mxu0 0.0
        %2405 = vmatpush1.msra.mxu0 0.0
        %2406 = vmatprep.subr.mxu0 0.0
        %2407 = vmatpush1.msra.mxu0 0.0
        %2408 = vmatprep.subr.mxu0 0.0
        %2409 = vmatpush1.msra.mxu0 0.0
        %2410 = vmatprep.subr.mxu0 0.0
        %2411 = vmatpush1.msra.mxu0 0.0
        %2412 = vmatprep.subr.mxu0 0.0
        %2413 = vmatpush1.msra.mxu0 0.0
        %2414 = vmatprep.subr.mxu0 0.0
        %2415 = vmatpush1.msra.mxu0 0.0
        %2416 = vmatprep.subr.mxu0 0.0
        %2417 = vmatpush1.msra.mxu0 0.0
        %2418 = vmatprep.subr.mxu0 0.0
        %2419 = vmatpush1.msra.mxu0 0.0
        %2420 = vmatprep.subr.mxu0 0.0
        %2421 = vmatpush1.msra.mxu0 0.0
        %2422 = vmatprep.subr.mxu0 0.0
        %2423 = vmatpush1.msra.mxu0 0.0
        %2424 = vmatprep.subr.mxu0 0.0
        %2425 = vmatpush1.msra.mxu0 0.0
        %2426 = vmatprep.subr.mxu0 0.0
        %2427 = vmatpush1.msra.mxu0 0.0
        %2428 = vmatprep.subr.mxu0 0.0
        %2429 = vmatpush1.msra.mxu0 0.0
        %2430 = vmatprep.subr.mxu0 0.0
        %2431 = vmatpush1.msra.mxu0 0.0
        %2432 = vmatprep.subr.mxu0 0.0
        %2433 = vmatpush1.msra.mxu0 0.0
        %2434 = vmatprep.subr.mxu0 0.0
        %2435 = vmatpush1.msra.mxu0 0.0
        %2436 = vmatprep.subr.mxu0 0.0
        %2437 = vmatpush1.msra.mxu0 0.0
        %2438 = vmatprep.subr.mxu0 0.0
        %2439 = vmatpush1.msra.mxu0 0.0
        %2440 = vmatprep.mubr.f32.mxu0 0.0
        %v2441 = vand.u32 %v1894, 4294901760
        %2442 = vmatmul.mubr.f32.gmra.mrb[0].mxu0 %v2441
        %v2443 = vpop.f32.mrb[0].mxu0
        %v2444 = vadd.f32 %v2361, %v2443
        %v2445 = vpop.f32.mrb[0].mxu0
        %2446 = vmatprep.mubr.f32.mxu0 0.0
        %v2447 = vand.u32 %v1897, 4294901760
        %2448 = vmatmul.mubr.f32.gmra.mrb[0].mxu0 %v2447
        %v2449 = vpop.f32.mrb[0].mxu0
        %v2450 = vadd.f32 %v2367, %v2449
        %v2451 = vpop.f32.mrb[0].mxu0
        %2452 = vdwg.mxu0
        %v2453 = vmul.f32 %v1324, 0.16666667
        %v2454 = vmul.f32 %v1330, 0.16666667
        %v2455 = vlaneseq
        %v2456 = vand.u32 %v2455, 127
        %vm2457 = vcmp.lt.s32.totalorder %v2456, 3
        %v2458 = vsel %vm2457, 1, 0
        %v2459 = vcvt.s32.f32 %v2458
        %v2460 = vmul.f32 %v247, %v247
        %v2461 = vmul.f32 %v248, %v248
        %v2462 = vmul.f32 %v2460, %v2459
        %v2463 = vmul.f32 %v2461, %v2459
        %v2464 = vsel %vm264, %v2462, 0.0
        %2465 = vadd.xlane.f32.xlu0 %v2464
        %v2466 = vpop.xlane.xlu0 %2465
        %v2467 = vsel %vm264, %v2463, 0.0
        %2468 = vadd.xlane.f32.xlu0 %v2467
        %v2469 = vpop.xlane.xlu0 %2468
        %v2470 = vmax.f32 %v2466, 1e-24
        %v2471 = vmax.f32 %v2469, 1e-24
        %v2472 = vrsqrt.pop %v2470
        %v2473 = vrsqrt.pop %v2471
        %v2474 = vmax.f32 %v2444, 1e-24
        %v2475 = vmax.f32 %v2450, 1e-24
        %v2476 = vrsqrt.pop %v2474
        %v2477 = vrsqrt.pop %v2475
        %v2478 = vmul.f32 %v2472, %v2476
        %v2479 = vmul.f32 %v2473, %v2477
        %v2480 = vmul.f32 %v1884, %v2478
        %v2481 = vmul.f32 %v1890, %v2479
        %v2482 = vsub.f32 1.0, %v2480
        %v2483 = vsub.f32 1.0, %v2481
        %v2484 = vmul.f32 %v2482, 0.5
        %v2485 = vmul.f32 %v2483, 0.5
        %v2486 = vadd.f32 %v2453, %v2484
        %v2487 = vadd.f32 %v2454, %v2485
        %vm2488 = vcmask 64512
        %v2489 = vsel %vm2488, %v2486, inf
        %2490 = vmin.xlane.f32.xlu0 %v2489
        %v2491 = vpop.xlane.xlu0 %2490
        %v2492 = vsel %vm2488, %v2487, inf
        %2493 = vmin.xlane.f32.xlu0 %v2492
        %v2494 = vpop.xlane.xlu0 %2493
        %v2495 = vrsqrt.pop %v2466
        %v2496 = vmul.f32 %v2466, %v2495
        %vm2497 = vcmp.eq.f32.partialorder %v2466, inf
        %v2498 = vsel %vm2497, %v2466, %v2496
        %vm2499 = vcmp.eq.f32.partialorder %v2466, 0.0
        %v2500 = vand.u32 %v2466, 2147483648
        %v2501 = vsel %vm2499, %v2500, %v2498
        %v2502 = vrsqrt.pop %v2469
        %v2503 = vmul.f32 %v2469, %v2502
        %vm2504 = vcmp.eq.f32.partialorder %v2469, inf
        %v2505 = vsel %vm2504, %v2469, %v2503
        %vm2506 = vcmp.eq.f32.partialorder %v2469, 0.0
        %v2507 = vand.u32 %v2469, 2147483648
        %v2508 = vsel %vm2506, %v2507, %v2505
        %v2509 = vsub.f32 1.0, %v2501
        %v2510 = vsub.f32 1.0, %v2508
        %v2511 = vand.u32 2147483647, %v2509
        %v2512 = vand.u32 2147483647, %v2510
        %v2513 = vadd.f32 %v2491, %v2511
        %v2514 = vadd.f32 %v2494, %v2512
        %s2515 = smul.u32 %s19, 16
        %v2516 = vlaneseq
        %v2517 = vshrl.u32 %v2516, 7
        %v2518 = vadd.s32 %v2517, 8
        %v2519 = vstv %s2515
        %v2520 = vadd.s32 %v2519, %v2517
        %v2521 = vadd.s32 %v2519, %v2518
        %vm2522 = vcmp.lt.s32.totalorder %v2520, 64
        %vm2523 = vcmp.lt.s32.totalorder %v2521, 64
        %v2524 = vsel %vm2522, %v2513, 0.0
        %v2525 = vsel %vm2523, %v2514, 0.0
        %vm2526 = vcmask 7168
        %v2527 = vsel %vm2526, %v2524, 0.0
        %v2528 = vsel %vm2526, %v2525, 0.0
        %v2529 = vadd.f32 %v2527, %v2528
        %2530 = vadd.xlane.f32.xlu0 %v2529
        %v2531 = vpop.xlane.xlu0 %2530
        %v2532 = vrot.slane %v2531, 4
        %v2533 = vadd.f32 %v2531, %v2532
        %v2534 = vrot.slane %v2533, 2
        %v2535 = vadd.f32 %v2533, %v2534
        %v2536 = vrot.slane %v2535, 1
        %v2537 = vadd.f32 %v2535, %v2536
        %s2538 = vtos %v2537
        %vm2539 = vcmp.eq.s32.totalorder %v2517, 0
        %vm2540 = vcmp.eq.s32.totalorder %v2456, 0
        %vm2541 = vmand %vm2539, %vm2540
        %v2542 = vstv %s2538
        %v2543 = vsel %vm2541, %v2542, 0.0
        %2544 = vst [vmem:[%s234] sm:$0xff] %v2543
        %s2545 = sand.u32 %s142, 1
        %s2546 = scalar_lea.sflag [#allocation3], %s2545
        %s2547 = sand.u32 %s142, 1
        %s2548 = smul.addr %s2547, 8
        %s2549 = scalar_lea.vmem [#allocation2], %s2548
        // Predicated region
        $region41: #{tpu_custom_call.1} parent=39 // pred_check
          %p2550 = pneg %p152
        $region42: #{tpu_custom_call.1} parent=39 // pred_check_branch
          %2552 = sbr.rel (%p2550) target = $region44
        $region43: #{tpu_custom_call.1} parent=39 // pred_region
          %s2554 = ssub.s32 128, 128
          %2555 = vsyncadd %s2546, %s2554
          %s2556 = smul.addr %s19, 128
          %s2557 = scalar_lea.hbm %s5, %s2556
          %s2559 = sshll.u32 %s2549, 4
          %s2560 = int_to_ptr.vmem [resolvable:$true] %s2559
          %2562 = dma.vmem_to_hbm [thread:$0]  %s2560, 128, %s2557, %s2546
        $region44: #{tpu_custom_call.1} parent=39 // pred_fallthru
          _
      $region40: #{tpu_custom_call.1} parent=5 // pred_fallthru
        _
      %p2563 = scmp.le.s32.totalorder 2, %s14
      // Predicated region
      $region45: #{tpu_custom_call.1} parent=5 // pred_check
        %p2564 = pneg %p2563
      $region46: #{tpu_custom_call.1} parent=5 // pred_check_branch
        %2566 = sbr.rel (%p2564) target = $region48
      $region47: #{tpu_custom_call.1} parent=5 // pred_region
        %s2567 = ssub.s32 %s14, 2
        // Predicated region
        $region49: #{tpu_custom_call.1} parent=47 // pred_check
          %p2568 = pneg %p158
        $region50: #{tpu_custom_call.1} parent=47 // pred_check_branch
          %2570 = sbr.rel (%p2568) target = $region52
        $region51: #{tpu_custom_call.1} parent=47 // pred_region
          %s2571 = sand.u32 %s143, 1
          %s2572 = scalar_lea.sflag [#allocation3], %s2571
          %s2573 = sand.u32 %s143, 1
          %s2574 = smul.addr %s2573, 8
          %s2575 = scalar_lea.vmem [#allocation2], %s2574
          %2576 = dma.done %s2572, 128
        $region52: #{tpu_custom_call.1} parent=47 // pred_fallthru
          _
      $region48: #{tpu_custom_call.1} parent=5 // pred_fallthru
        _
    $region6: #{tpu_custom_call.1} parent=1 // loop_footer
      %s18 = sadd.s32 1, %s14
    $region7: #{tpu_custom_call.1} parent=1 // loop_footer_branch
      %13 = sbr.rel target = $region3
    $region8: #{tpu_custom_call.1} parent=1 // loop_exit
      _
    %2577 = vsyncpa [#allocation3], 1
    %s2578 = scalar_lea.sflag [#allocation3], 1
    %2579 = vsyncpa %s2578, 1

</llo_original>
